<compile_context>
chip_gen: v7x
topology: tpu7x:2x2x1
jax: 0.10.0
libtpu: 0.0.40
codegen_flags: <defaults>
</compile_context>

<pallas_src>
import functools

import jax
import jax.numpy as jnp
from jax import lax
from jax.experimental import pallas as pl
from jax.experimental.pallas import tpu as pltpu

EPS = 1e-5
MXU_DTYPE = jnp.bfloat16      # matmul operand dtype; accumulation is always f32


# --------------------------------------------------------------------------- kernels
def _conv3x3_taps(x_f32, w_ref, m_ref, H, W):
    """3x3 'SAME' convolution of one image as 9 shifted MXU dots.

    x_f32: (Cin, H*W) f32 activations, column p = i*W + j.
    w_ref: (9, Cout, Cin) bf16 ref, tap t = (dy+1)*3 + (dx+1).
    m_ref: (9, 1, H*W) f32 ref of border masks (row 4 is all-ones / unused).
    """
    HW = H * W
    # Centre tap: no roll, no mask; it initializes the accumulator (no zeros+add).
    acc = jnp.dot(w_ref[4], x_f32.astype(MXU_DTYPE),
                  preferred_element_type=jnp.float32)
    for t in (0, 1, 2, 3, 5, 6, 7, 8):
        dy, dx = t // 3 - 1, t % 3 - 1
        shift = dy * W + dx          # output position p reads input position p+shift
        src = pltpu.roll(x_f32, shift=(-shift) % HW, axis=1) * m_ref[t]
        acc = acc + jnp.dot(w_ref[t], src.astype(MXU_DTYPE),
                            preferred_element_type=jnp.float32)
    return acc


def _write_stats(stats_ref, y):
    # Per-image partial BN statistics (sum, sum of squares) per channel.
    stats_ref[:, 0:1] = jnp.sum(y, axis=1, keepdims=True)
    stats_ref[:, 1:2] = jnp.sum(y * y, axis=1, keepdims=True)


def _conv1_kernel(x_ref, w_ref, m_ref, y_ref, stats_ref, *, H, W):
    y = _conv3x3_taps(x_ref[...], w_ref, m_ref, H, W)
    y_ref[...] = y
    _write_stats(stats_ref, y)


def _bn_relu_conv2_kernel(y1_ref, bn1_ref, w_ref, m_ref, y2_ref, stats_ref, *, H, W):
    scale = bn1_ref[:, 0:1]
    shift = bn1_ref[:, 1:2]
    h = jnp.maximum(y1_ref[...] * scale + shift, 0.0)       # BN1 + ReLU, f32
    y = _conv3x3_taps(h, w_ref, m_ref, H, W)
    y2_ref[...] = y
    _write_stats(stats_ref, y)


def _bn_residual_kernel(y2_ref, bn2_ref, x_ref, out_ref):
    scale = bn2_ref[:, 0:1]
    shift = bn2_ref[:, 1:2]
    out_ref[...] = x_ref[...] + (y2_ref[...] * scale + shift)   # BN2 + residual, f32


# --------------------------------------------------------------------------- wrapper
def _border_masks(H, W):
    """(9, 1, H*W) f32: mask[t, 0, p] == 1 iff tap (dy,dx)=(t//3-1, t%3-1) of output
    position p stays inside the image ('SAME' zero padding)."""
    r = jnp.arange(H * W, dtype=jnp.int32) // W
    c = jnp.arange(H * W, dtype=jnp.int32) % W
    rows = []
    for t in range(9):
        dy, dx = t // 3 - 1, t % 3 - 1
        rows.append((r >= -dy) & (r <= H - 1 - dy) & (c >= -dx) & (c <= W - 1 - dx))
    return jnp.stack(rows).astype(jnp.float32).reshape(9, 1, H * W)


def _bn_affine(stats, gamma, beta, count):
    """Fold per-image partial sums into the training-mode BN affine (scale, shift)."""
    s = jnp.sum(stats, axis=0)                    # (C, 2)
    mean = s[:, 0] / count
    var = s[:, 1] / count - mean * mean           # biased, one-pass batch variance
    scale = gamma * lax.rsqrt(var + EPS)
    shift = beta - mean * scale
    return jnp.stack([scale, shift], axis=1)      # (C, 2) f32


def residual_block_pallas(x_nchw, params):
    x = x_nchw.astype(jnp.float32)
    N, C, H, W = x.shape
    HW = H * W
    assert HW % 128 == 0, "H*W must be a multiple of 128 (lane-dense slabs, safe rolls)"

    # Pad channels to a multiple of 8 (sublane) so vregs / stores are dense.
    C_pad = (C + 7) // 8 * 8
    pc = C_pad - C

    # Channel-major activations (N, C_pad, H*W); the residual uses the same layout.
    x_cp = jnp.pad(x, ((0, 0), (0, pc), (0, 0), (0, 0))).reshape(N, C_pad, HW)

    def prep_w(w_oihw):  # OIHW -> (9, Cout_pad, Cin_pad) tap-major bf16 MXU operand
        wp = jnp.pad(w_oihw.astype(jnp.float32), ((0, pc), (0, pc), (0, 0), (0, 0)))
        return jnp.transpose(wp, (2, 3, 0, 1)).reshape(9, C_pad, C_pad).astype(MXU_DTYPE)

    w1 = prep_w(params["w1"])
    w2 = prep_w(params["w2"])
    pad_c = lambda v: jnp.pad(v.astype(jnp.float32), (0, pc))
    g1, be1 = pad_c(params["g1"]), pad_c(params["beta1"])
    g2, be2 = pad_c(params["g2"]), pad_c(params["beta2"])
    masks = _border_masks(H, W)
    # Conv biases b1/b2 are dropped: a per-channel constant is cancelled exactly by
    # the batch-mean subtraction of the (training-mode) BatchNorm that follows.

    act_spec = pl.BlockSpec((None, C_pad, HW), lambda n: (n, 0, 0))   # one image / step
    stats_spec = pl.BlockSpec((None, C_pad, 2), lambda n: (n, 0, 0))
    w_spec = pl.BlockSpec((9, C_pad, C_pad), lambda n: (0, 0, 0))     # VMEM-resident
    m_spec = pl.BlockSpec((9, 1, HW), lambda n: (0, 0, 0))            # VMEM-resident
    bn_spec = pl.BlockSpec((C_pad, 2), lambda n: (0, 0))              # VMEM-resident
    act_shape = jax.ShapeDtypeStruct((N, C_pad, HW), jnp.float32)
    stats_shape = jax.ShapeDtypeStruct((N, C_pad, 2), jnp.float32)
    cparams = pltpu.CompilerParams(
        dimension_semantics=("parallel",),     # images independent -> megacore shards
        vmem_limit_bytes=32 * 1024 * 1024,     # per-step blocks are tiny; v7x-safe
    )

    # Pass 1: conv1 + per-image partial BN1 stats.
    y1, st1 = pl.pallas_call(
        functools.partial(_conv1_kernel, H=H, W=W),
        grid=(N,),
        in_specs=[act_spec, w_spec, m_spec],
        out_specs=(act_spec, stats_spec),
        out_shape=(act_shape, stats_shape),
        compiler_params=cparams,
    )(x_cp, w1, masks)

    bn1 = _bn_affine(st1, g1, be1, float(N * HW))

    # Pass 2: BN1 + ReLU + conv2 + per-image partial BN2 stats.
    y2, st2 = pl.pallas_call(
        functools.partial(_bn_relu_conv2_kernel, H=H, W=W),
        grid=(N,),
        in_specs=[act_spec, bn_spec, w_spec, m_spec],
        out_specs=(act_spec, stats_spec),
        out_shape=(act_shape, stats_shape),
        compiler_params=cparams,
    )(y1, bn1, w2, masks)

    bn2 = _bn_affine(st2, g2, be2, float(N * HW))

    # Pass 3: BN2 + residual add (dense, unmasked (C_pad, HW) stores).
    out = pl.pallas_call(
        _bn_residual_kernel,
        grid=(N,),
        in_specs=[act_spec, bn_spec, act_spec],
        out_specs=act_spec,
        out_shape=act_shape,
        compiler_params=cparams,
    )(y2, bn2, x_cp)

    return out.reshape(N, C_pad, H, W)[:, :C]


# ------------------------------------------------------------------------- reference
def residual_block_ref(x_nchw, params, conv_dtype=jnp.float32):
    """Pure-JAX reference matching the PyTorch module (training-mode BN, with bias).
    conv_dtype=bfloat16 mirrors the kernel's bf16 MXU operands (f32 accumulation)."""
    x = jnp.transpose(x_nchw, (0, 2, 3, 1)).astype(jnp.float32)   # NHWC

    def conv(h, w_oihw, b):
        w_hwio = jnp.transpose(w_oihw, (2, 3, 1, 0))
        y = lax.conv_general_dilated(
            h.astype(conv_dtype), w_hwio.astype(conv_dtype),
            window_strides=(1, 1), padding="SAME",
            dimension_numbers=("NHWC", "HWIO", "NHWC"),
            preferred_element_type=jnp.float32)
        return y + b

    def bn(y, g, be):
        mu = y.mean(axis=(0, 1, 2), keepdims=True)
        var = ((y - mu) ** 2).mean(axis=(0, 1, 2), keepdims=True)
        return (y - mu) * lax.rsqrt(var + EPS) * g + be

    h = bn(conv(x, params["w1"], params["b1"]), params["g1"], params["beta1"])
    h = jnp.maximum(h, 0.0)
    h = bn(conv(h, params["w2"], params["b2"]), params["g2"], params["beta2"])
    return jnp.transpose(x + h, (0, 3, 1, 2))


def init_params(key, C):
    ks = jax.random.split(key, 8)
    return {
        "w1": 0.1 * jax.random.normal(ks[0], (C, C, 3, 3), jnp.float32),   # OIHW
        "b1": 0.1 * jax.random.normal(ks[1], (C,), jnp.float32),
        "g1": 1.0 + 0.1 * jax.random.normal(ks[2], (C,), jnp.float32),
        "beta1": 0.1 * jax.random.normal(ks[3], (C,), jnp.float32),
        "w2": 0.1 * jax.random.normal(ks[4], (C, C, 3, 3), jnp.float32),
        "b2": 0.1 * jax.random.normal(ks[5], (C,), jnp.float32),
        "g2": 1.0 + 0.1 * jax.random.normal(ks[6], (C,), jnp.float32),
        "beta2": 0.1 * jax.random.normal(ks[7], (C,), jnp.float32),
    }


if __name__ == "__main__":
    key = jax.random.PRNGKey(0)
    kx, kp = jax.random.split(key)

    N, C, H, W = 2, 4, 16, 16
    x = jax.random.normal(kx, (N, C, H, W), jnp.float32)        # NCHW (PyTorch layout)
    params = init_params(kp, C)

    out = jax.block_until_ready(jax.jit(residual_block_pallas)(x, params))
    assert out.shape == (N, C, H, W)

    # Structural check vs a reference that mirrors the kernel's bf16 MXU operands
    # (f32 accumulation): residual differences are f32 reassociation, the one-pass
    # batch variance, and rare one-ulp bf16 rounding boundaries on the conv2 input.
    ref_bf = jax.block_until_ready(residual_block_ref(x, params, conv_dtype=MXU_DTYPE))
    err_bf = float(jnp.max(jnp.abs(out - ref_bf)))
    assert err_bf < 5e-2, f"mismatch vs bf16-operand reference: {err_bf}"

    # Fidelity check vs the full-f32 module semantics; the slack covers the bf16
    # rounding of the MXU operands inside the two convolutions.
    ref32 = jax.block_until_ready(residual_block_ref(x, params))
    err32 = float(jnp.max(jnp.abs(out - ref32)))
    assert err32 < 2e-1, f"mismatch vs f32 reference: {err32}"

    print("KERNEL_OK")
</pallas_src>

<mosaic_0001>
module attributes {stable_mosaic.version = 11 : i64} {
  func.func @_conv1_kernel(%arg0: i32, %arg1: memref<1x8x256xf32, #tpu.memory_space<vmem>>, %arg2: memref<9x8x8xbf16, #tpu.memory_space<vmem>>, %arg3: memref<9x1x256xf32, #tpu.memory_space<vmem>>, %arg4: memref<1x8x256xf32, #tpu.memory_space<vmem>>, %arg5: memref<1x8x2xf32, #tpu.memory_space<vmem>>) attributes {dimension_semantics = [#tpu.dimension_semantics<parallel>], iteration_bounds = array<i64: 2>, scalar_prefetch = 0 : i64, scratch_operands = 0 : i64, tpu.core_type = #tpu.core_type<tc>, window_params = [{transform_indices = @transform_0, window_bounds = array<i64: 1, 8, 256>}, {pipeline_mode = #tpu.pipeline_mode<synchronous>, transform_indices = @transform_1, window_bounds = array<i64: 9, 8, 8>}, {pipeline_mode = #tpu.pipeline_mode<synchronous>, transform_indices = @transform_2, window_bounds = array<i64: 9, 1, 256>}, {transform_indices = @transform_3, window_bounds = array<i64: 1, 8, 256>}, {transform_indices = @transform_4, window_bounds = array<i64: 1, 8, 2>}]} {
    %c0 = arith.constant 0 : index
    %c0_0 = arith.constant 0 : index
    %c0_1 = arith.constant 0 : index
    %0 = vector.load %arg1[%c0, %c0_0, %c0_1] : memref<1x8x256xf32, #tpu.memory_space<vmem>>, vector<1x8x256xf32>
    %1 = vector.shape_cast %0 : vector<1x8x256xf32> to vector<8x256xf32>
    %c4 = arith.constant 4 : index
    %c0_2 = arith.constant 0 : index
    %c0_3 = arith.constant 0 : index
    %2 = vector.load %arg2[%c4, %c0_2, %c0_3] : memref<9x8x8xbf16, #tpu.memory_space<vmem>>, vector<1x8x8xbf16>
    %3 = vector.shape_cast %2 : vector<1x8x8xbf16> to vector<8x8xbf16>
    %4 = arith.truncf %1 : vector<8x256xf32> to vector<8x256xbf16>
    %cst = arith.constant dense<0.000000e+00> : vector<8x256xf32>
    %5 = tpu.matmul %3, %4, %cst {dimension_numbers = #tpu.dot_dimension_numbers<[1], [0], [0], [1], [0, 0, 1, 1], [], []>} : vector<8x8xbf16>, vector<8x256xbf16>, vector<8x256xf32> -> vector<8x256xf32>
    %c17_i32 = arith.constant 17 : i32
    %6 = tpu.dynamic_rotate %1 by %c17_i32 dim 1 : vector<8x256xf32>, i32 -> vector<8x256xf32>
    %c0_4 = arith.constant 0 : index
    %c0_5 = arith.constant 0 : index
    %c0_6 = arith.constant 0 : index
    %7 = vector.load %arg3[%c0_4, %c0_5, %c0_6] : memref<9x1x256xf32, #tpu.memory_space<vmem>>, vector<1x1x256xf32>
    %8 = vector.shape_cast %7 : vector<1x1x256xf32> to vector<1x256xf32>
    %9 = vector.broadcast %8 : vector<1x256xf32> to vector<8x256xf32>
    %10 = arith.mulf %6, %9 : vector<8x256xf32>
    %c0_7 = arith.constant 0 : index
    %c0_8 = arith.constant 0 : index
    %c0_9 = arith.constant 0 : index
    %11 = vector.load %arg2[%c0_7, %c0_8, %c0_9] : memref<9x8x8xbf16, #tpu.memory_space<vmem>>, vector<1x8x8xbf16>
    %12 = vector.shape_cast %11 : vector<1x8x8xbf16> to vector<8x8xbf16>
    %13 = arith.truncf %10 : vector<8x256xf32> to vector<8x256xbf16>
    %cst_10 = arith.constant dense<0.000000e+00> : vector<8x256xf32>
    %14 = tpu.matmul %12, %13, %cst_10 {dimension_numbers = #tpu.dot_dimension_numbers<[1], [0], [0], [1], [0, 0, 1, 1], [], []>} : vector<8x8xbf16>, vector<8x256xbf16>, vector<8x256xf32> -> vector<8x256xf32>
    %15 = arith.addf %5, %14 : vector<8x256xf32>
    %c16_i32 = arith.constant 16 : i32
    %16 = tpu.dynamic_rotate %1 by %c16_i32 dim 1 : vector<8x256xf32>, i32 -> vector<8x256xf32>
    %c1 = arith.constant 1 : index
    %c0_11 = arith.constant 0 : index
    %c0_12 = arith.constant 0 : index
    %17 = vector.load %arg3[%c1, %c0_11, %c0_12] : memref<9x1x256xf32, #tpu.memory_space<vmem>>, vector<1x1x256xf32>
    %18 = vector.shape_cast %17 : vector<1x1x256xf32> to vector<1x256xf32>
    %19 = vector.broadcast %18 : vector<1x256xf32> to vector<8x256xf32>
    %20 = arith.mulf %16, %19 : vector<8x256xf32>
    %c1_13 = arith.constant 1 : index
    %c0_14 = arith.constant 0 : index
    %c0_15 = arith.constant 0 : index
    %21 = vector.load %arg2[%c1_13, %c0_14, %c0_15] : memref<9x8x8xbf16, #tpu.memory_space<vmem>>, vector<1x8x8xbf16>
    %22 = vector.shape_cast %21 : vector<1x8x8xbf16> to vector<8x8xbf16>
    %23 = arith.truncf %20 : vector<8x256xf32> to vector<8x256xbf16>
    %cst_16 = arith.constant dense<0.000000e+00> : vector<8x256xf32>
    %24 = tpu.matmul %22, %23, %cst_16 {dimension_numbers = #tpu.dot_dimension_numbers<[1], [0], [0], [1], [0, 0, 1, 1], [], []>} : vector<8x8xbf16>, vector<8x256xbf16>, vector<8x256xf32> -> vector<8x256xf32>
    %25 = arith.addf %15, %24 : vector<8x256xf32>
    %c15_i32 = arith.constant 15 : i32
    %26 = tpu.dynamic_rotate %1 by %c15_i32 dim 1 : vector<8x256xf32>, i32 -> vector<8x256xf32>
    %c2 = arith.constant 2 : index
    %c0_17 = arith.constant 0 : index
    %c0_18 = arith.constant 0 : index
    %27 = vector.load %arg3[%c2, %c0_17, %c0_18] : memref<9x1x256xf32, #tpu.memory_space<vmem>>, vector<1x1x256xf32>
    %28 = vector.shape_cast %27 : vector<1x1x256xf32> to vector<1x256xf32>
    %29 = vector.broadcast %28 : vector<1x256xf32> to vector<8x256xf32>
    %30 = arith.mulf %26, %29 : vector<8x256xf32>
    %c2_19 = arith.constant 2 : index
    %c0_20 = arith.constant 0 : index
    %c0_21 = arith.constant 0 : index
    %31 = vector.load %arg2[%c2_19, %c0_20, %c0_21] : memref<9x8x8xbf16, #tpu.memory_space<vmem>>, vector<1x8x8xbf16>
    %32 = vector.shape_cast %31 : vector<1x8x8xbf16> to vector<8x8xbf16>
    %33 = arith.truncf %30 : vector<8x256xf32> to vector<8x256xbf16>
    %cst_22 = arith.constant dense<0.000000e+00> : vector<8x256xf32>
    %34 = tpu.matmul %32, %33, %cst_22 {dimension_numbers = #tpu.dot_dimension_numbers<[1], [0], [0], [1], [0, 0, 1, 1], [], []>} : vector<8x8xbf16>, vector<8x256xbf16>, vector<8x256xf32> -> vector<8x256xf32>
    %35 = arith.addf %25, %34 : vector<8x256xf32>
    %c1_i32 = arith.constant 1 : i32
    %36 = tpu.dynamic_rotate %1 by %c1_i32 dim 1 : vector<8x256xf32>, i32 -> vector<8x256xf32>
    %c3 = arith.constant 3 : index
    %c0_23 = arith.constant 0 : index
    %c0_24 = arith.constant 0 : index
    %37 = vector.load %arg3[%c3, %c0_23, %c0_24] : memref<9x1x256xf32, #tpu.memory_space<vmem>>, vector<1x1x256xf32>
    %38 = vector.shape_cast %37 : vector<1x1x256xf32> to vector<1x256xf32>
    %39 = vector.broadcast %38 : vector<1x256xf32> to vector<8x256xf32>
    %40 = arith.mulf %36, %39 : vector<8x256xf32>
    %c3_25 = arith.constant 3 : index
    %c0_26 = arith.constant 0 : index
    %c0_27 = arith.constant 0 : index
    %41 = vector.load %arg2[%c3_25, %c0_26, %c0_27] : memref<9x8x8xbf16, #tpu.memory_space<vmem>>, vector<1x8x8xbf16>
    %42 = vector.shape_cast %41 : vector<1x8x8xbf16> to vector<8x8xbf16>
    %43 = arith.truncf %40 : vector<8x256xf32> to vector<8x256xbf16>
    %cst_28 = arith.constant dense<0.000000e+00> : vector<8x256xf32>
    %44 = tpu.matmul %42, %43, %cst_28 {dimension_numbers = #tpu.dot_dimension_numbers<[1], [0], [0], [1], [0, 0, 1, 1], [], []>} : vector<8x8xbf16>, vector<8x256xbf16>, vector<8x256xf32> -> vector<8x256xf32>
    %45 = arith.addf %35, %44 : vector<8x256xf32>
    %c255_i32 = arith.constant 255 : i32
    %46 = tpu.dynamic_rotate %1 by %c255_i32 dim 1 : vector<8x256xf32>, i32 -> vector<8x256xf32>
    %c5 = arith.constant 5 : index
    %c0_29 = arith.constant 0 : index
    %c0_30 = arith.constant 0 : index
    %47 = vector.load %arg3[%c5, %c0_29, %c0_30] : memref<9x1x256xf32, #tpu.memory_space<vmem>>, vector<1x1x256xf32>
    %48 = vector.shape_cast %47 : vector<1x1x256xf32> to vector<1x256xf32>
    %49 = vector.broadcast %48 : vector<1x256xf32> to vector<8x256xf32>
    %50 = arith.mulf %46, %49 : vector<8x256xf32>
    %c5_31 = arith.constant 5 : index
    %c0_32 = arith.constant 0 : index
    %c0_33 = arith.constant 0 : index
    %51 = vector.load %arg2[%c5_31, %c0_32, %c0_33] : memref<9x8x8xbf16, #tpu.memory_space<vmem>>, vector<1x8x8xbf16>
    %52 = vector.shape_cast %51 : vector<1x8x8xbf16> to vector<8x8xbf16>
    %53 = arith.truncf %50 : vector<8x256xf32> to vector<8x256xbf16>
    %cst_34 = arith.constant dense<0.000000e+00> : vector<8x256xf32>
    %54 = tpu.matmul %52, %53, %cst_34 {dimension_numbers = #tpu.dot_dimension_numbers<[1], [0], [0], [1], [0, 0, 1, 1], [], []>} : vector<8x8xbf16>, vector<8x256xbf16>, vector<8x256xf32> -> vector<8x256xf32>
    %55 = arith.addf %45, %54 : vector<8x256xf32>
    %c241_i32 = arith.constant 241 : i32
    %56 = tpu.dynamic_rotate %1 by %c241_i32 dim 1 : vector<8x256xf32>, i32 -> vector<8x256xf32>
    %c6 = arith.constant 6 : index
    %c0_35 = arith.constant 0 : index
    %c0_36 = arith.constant 0 : index
    %57 = vector.load %arg3[%c6, %c0_35, %c0_36] : memref<9x1x256xf32, #tpu.memory_space<vmem>>, vector<1x1x256xf32>
    %58 = vector.shape_cast %57 : vector<1x1x256xf32> to vector<1x256xf32>
    %59 = vector.broadcast %58 : vector<1x256xf32> to vector<8x256xf32>
    %60 = arith.mulf %56, %59 : vector<8x256xf32>
    %c6_37 = arith.constant 6 : index
    %c0_38 = arith.constant 0 : index
    %c0_39 = arith.constant 0 : index
    %61 = vector.load %arg2[%c6_37, %c0_38, %c0_39] : memref<9x8x8xbf16, #tpu.memory_space<vmem>>, vector<1x8x8xbf16>
    %62 = vector.shape_cast %61 : vector<1x8x8xbf16> to vector<8x8xbf16>
    %63 = arith.truncf %60 : vector<8x256xf32> to vector<8x256xbf16>
    %cst_40 = arith.constant dense<0.000000e+00> : vector<8x256xf32>
    %64 = tpu.matmul %62, %63, %cst_40 {dimension_numbers = #tpu.dot_dimension_numbers<[1], [0], [0], [1], [0, 0, 1, 1], [], []>} : vector<8x8xbf16>, vector<8x256xbf16>, vector<8x256xf32> -> vector<8x256xf32>
    %65 = arith.addf %55, %64 : vector<8x256xf32>
    %c240_i32 = arith.constant 240 : i32
    %66 = tpu.dynamic_rotate %1 by %c240_i32 dim 1 : vector<8x256xf32>, i32 -> vector<8x256xf32>
    %c7 = arith.constant 7 : index
    %c0_41 = arith.constant 0 : index
    %c0_42 = arith.constant 0 : index
    %67 = vector.load %arg3[%c7, %c0_41, %c0_42] : memref<9x1x256xf32, #tpu.memory_space<vmem>>, vector<1x1x256xf32>
    %68 = vector.shape_cast %67 : vector<1x1x256xf32> to vector<1x256xf32>
    %69 = vector.broadcast %68 : vector<1x256xf32> to vector<8x256xf32>
    %70 = arith.mulf %66, %69 : vector<8x256xf32>
    %c7_43 = arith.constant 7 : index
    %c0_44 = arith.constant 0 : index
    %c0_45 = arith.constant 0 : index
    %71 = vector.load %arg2[%c7_43, %c0_44, %c0_45] : memref<9x8x8xbf16, #tpu.memory_space<vmem>>, vector<1x8x8xbf16>
    %72 = vector.shape_cast %71 : vector<1x8x8xbf16> to vector<8x8xbf16>
    %73 = arith.truncf %70 : vector<8x256xf32> to vector<8x256xbf16>
    %cst_46 = arith.constant dense<0.000000e+00> : vector<8x256xf32>
    %74 = tpu.matmul %72, %73, %cst_46 {dimension_numbers = #tpu.dot_dimension_numbers<[1], [0], [0], [1], [0, 0, 1, 1], [], []>} : vector<8x8xbf16>, vector<8x256xbf16>, vector<8x256xf32> -> vector<8x256xf32>
    %75 = arith.addf %65, %74 : vector<8x256xf32>
    %c239_i32 = arith.constant 239 : i32
    %76 = tpu.dynamic_rotate %1 by %c239_i32 dim 1 : vector<8x256xf32>, i32 -> vector<8x256xf32>
    %c8 = arith.constant 8 : index
    %c0_47 = arith.constant 0 : index
    %c0_48 = arith.constant 0 : index
    %77 = vector.load %arg3[%c8, %c0_47, %c0_48] : memref<9x1x256xf32, #tpu.memory_space<vmem>>, vector<1x1x256xf32>
    %78 = vector.shape_cast %77 : vector<1x1x256xf32> to vector<1x256xf32>
    %79 = vector.broadcast %78 : vector<1x256xf32> to vector<8x256xf32>
    %80 = arith.mulf %76, %79 : vector<8x256xf32>
    %c8_49 = arith.constant 8 : index
    %c0_50 = arith.constant 0 : index
    %c0_51 = arith.constant 0 : index
    %81 = vector.load %arg2[%c8_49, %c0_50, %c0_51] : memref<9x8x8xbf16, #tpu.memory_space<vmem>>, vector<1x8x8xbf16>
    %82 = vector.shape_cast %81 : vector<1x8x8xbf16> to vector<8x8xbf16>
    %83 = arith.truncf %80 : vector<8x256xf32> to vector<8x256xbf16>
    %cst_52 = arith.constant dense<0.000000e+00> : vector<8x256xf32>
    %84 = tpu.matmul %82, %83, %cst_52 {dimension_numbers = #tpu.dot_dimension_numbers<[1], [0], [0], [1], [0, 0, 1, 1], [], []>} : vector<8x8xbf16>, vector<8x256xbf16>, vector<8x256xf32> -> vector<8x256xf32>
    %85 = arith.addf %75, %84 : vector<8x256xf32>
    %c0_53 = arith.constant 0 : index
    %c0_54 = arith.constant 0 : index
    %c0_55 = arith.constant 0 : index
    %86 = vector.load %arg4[%c0_53, %c0_54, %c0_55] : memref<1x8x256xf32, #tpu.memory_space<vmem>>, vector<1x8x256xf32>
    %87 = vector.shape_cast %86 : vector<1x8x256xf32> to vector<8x256xf32>
    %88 = vector.shape_cast %85 : vector<8x256xf32> to vector<1x8x256xf32>
    tpu.vector_store %arg4[%c0_53, %c0_54, %c0_55], %88 {strides = array<i32>} : memref<1x8x256xf32, #tpu.memory_space<vmem>>, vector<1x8x256xf32>,
    %cst_56 = arith.constant dense<0.000000e+00> : vector<8xf32>
    %89 = vector.multi_reduction <add>, %85, %cst_56 [1] : vector<8x256xf32> to vector<8xf32>
    %90 = vector.shape_cast %89 : vector<8xf32> to vector<8x1xf32>
    %c0_57 = arith.constant 0 : index
    %c0_58 = arith.constant 0 : index
    %c0_59 = arith.constant 0 : index
    %91 = vector.load %arg5[%c0_57, %c0_58, %c0_59] : memref<1x8x2xf32, #tpu.memory_space<vmem>>, vector<1x8x1xf32>
    %92 = vector.shape_cast %91 : vector<1x8x1xf32> to vector<8x1xf32>
    %93 = vector.shape_cast %90 : vector<8x1xf32> to vector<1x8x1xf32>
    tpu.vector_store %arg5[%c0_57, %c0_58, %c0_59], %93 {strides = array<i32>} : memref<1x8x2xf32, #tpu.memory_space<vmem>>, vector<1x8x1xf32>,
    %94 = arith.mulf %85, %85 : vector<8x256xf32>
    %cst_60 = arith.constant dense<0.000000e+00> : vector<8xf32>
    %95 = vector.multi_reduction <add>, %94, %cst_60 [1] : vector<8x256xf32> to vector<8xf32>
    %96 = vector.shape_cast %95 : vector<8xf32> to vector<8x1xf32>
    %c0_61 = arith.constant 0 : index
    %c0_62 = arith.constant 0 : index
    %c1_63 = arith.constant 1 : index
    %97 = vector.load %arg5[%c0_61, %c0_62, %c1_63] : memref<1x8x2xf32, #tpu.memory_space<vmem>>, vector<1x8x1xf32>
    %98 = vector.shape_cast %97 : vector<1x8x1xf32> to vector<8x1xf32>
    %99 = vector.shape_cast %96 : vector<8x1xf32> to vector<1x8x1xf32>
    tpu.vector_store %arg5[%c0_61, %c0_62, %c1_63], %99 {strides = array<i32>} : memref<1x8x2xf32, #tpu.memory_space<vmem>>, vector<1x8x1xf32>,
    return
  }
  func.func @transform_0(%arg0: i32) -> (i32, i32, i32) {
    %c0_i32 = arith.constant 0 : i32
    %c0_i32_0 = arith.constant 0 : i32
    %c0_i32_1 = arith.constant 0 : i32
    return %arg0, %c0_i32, %c0_i32_0 : i32, i32, i32
  }
  func.func @transform_1(%arg0: i32) -> (i32, i32, i32) {
    %c0_i32 = arith.constant 0 : i32
    %c0_i32_0 = arith.constant 0 : i32
    %c0_i32_1 = arith.constant 0 : i32
    %c0_i32_2 = arith.constant 0 : i32
    return %c0_i32, %c0_i32_0, %c0_i32_1 : i32, i32, i32
  }
  func.func @transform_2(%arg0: i32) -> (i32, i32, i32) {
    %c0_i32 = arith.constant 0 : i32
    %c0_i32_0 = arith.constant 0 : i32
    %c0_i32_1 = arith.constant 0 : i32
    %c0_i32_2 = arith.constant 0 : i32
    return %c0_i32, %c0_i32_0, %c0_i32_1 : i32, i32, i32
  }
  func.func @transform_3(%arg0: i32) -> (i32, i32, i32) {
    %c0_i32 = arith.constant 0 : i32
    %c0_i32_0 = arith.constant 0 : i32
    %c0_i32_1 = arith.constant 0 : i32
    return %arg0, %c0_i32, %c0_i32_0 : i32, i32, i32
  }
  func.func @transform_4(%arg0: i32) -> (i32, i32, i32) {
    %c0_i32 = arith.constant 0 : i32
    %c0_i32_0 = arith.constant 0 : i32
    %c0_i32_1 = arith.constant 0 : i32
    return %arg0, %c0_i32, %c0_i32_0 : i32, i32, i32
  }
}

module attributes {stable_mosaic.version = 11 : i64} {
  func.func @_bn_residual_kernel(%arg0: i32, %arg1: memref<1x8x256xf32, #tpu.memory_space<vmem>>, %arg2: memref<8x2xf32, #tpu.memory_space<vmem>>, %arg3: memref<1x8x256xf32, #tpu.memory_space<vmem>>, %arg4: memref<1x8x256xf32, #tpu.memory_space<vmem>>) attributes {dimension_semantics = [#tpu.dimension_semantics<parallel>], iteration_bounds = array<i64: 2>, scalar_prefetch = 0 : i64, scratch_operands = 0 : i64, tpu.core_type = #tpu.core_type<tc>, window_params = [{transform_indices = @transform_0, window_bounds = array<i64: 1, 8, 256>}, {pipeline_mode = #tpu.pipeline_mode<synchronous>, transform_indices = @transform_1, window_bounds = array<i64: 8, 2>}, {transform_indices = @transform_2, window_bounds = array<i64: 1, 8, 256>}, {transform_indices = @transform_3, window_bounds = array<i64: 1, 8, 256>}]} {
    %c0 = arith.constant 0 : index
    %c0_0 = arith.constant 0 : index
    %0 = vector.load %arg2[%c0, %c0_0] : memref<8x2xf32, #tpu.memory_space<vmem>>, vector<8x1xf32>
    %c0_1 = arith.constant 0 : index
    %c1 = arith.constant 1 : index
    %1 = vector.load %arg2[%c0_1, %c1] : memref<8x2xf32, #tpu.memory_space<vmem>>, vector<8x1xf32>
    %c0_2 = arith.constant 0 : index
    %c0_3 = arith.constant 0 : index
    %c0_4 = arith.constant 0 : index
    %2 = vector.load %arg3[%c0_2, %c0_3, %c0_4] : memref<1x8x256xf32, #tpu.memory_space<vmem>>, vector<1x8x256xf32>
    %3 = vector.shape_cast %2 : vector<1x8x256xf32> to vector<8x256xf32>
    %c0_5 = arith.constant 0 : index
    %c0_6 = arith.constant 0 : index
    %c0_7 = arith.constant 0 : index
    %4 = vector.load %arg1[%c0_5, %c0_6, %c0_7] : memref<1x8x256xf32, #tpu.memory_space<vmem>>, vector<1x8x256xf32>
    %5 = vector.shape_cast %4 : vector<1x8x256xf32> to vector<8x256xf32>
    %6 = vector.broadcast %0 : vector<8x1xf32> to vector<8x256xf32>
    %7 = arith.mulf %5, %6 : vector<8x256xf32>
    %8 = vector.broadcast %1 : vector<8x1xf32> to vector<8x256xf32>
    %9 = arith.addf %7, %8 : vector<8x256xf32>
    %10 = arith.addf %3, %9 : vector<8x256xf32>
    %c0_8 = arith.constant 0 : index
    %c0_9 = arith.constant 0 : index
    %c0_10 = arith.constant 0 : index
    %11 = vector.load %arg4[%c0_8, %c0_9, %c0_10] : memref<1x8x256xf32, #tpu.memory_space<vmem>>, vector<1x8x256xf32>
    %12 = vector.shape_cast %11 : vector<1x8x256xf32> to vector<8x256xf32>
    %13 = vector.shape_cast %10 : vector<8x256xf32> to vector<1x8x256xf32>
    tpu.vector_store %arg4[%c0_8, %c0_9, %c0_10], %13 {strides = array<i32>} : memref<1x8x256xf32, #tpu.memory_space<vmem>>, vector<1x8x256xf32>,
    return
  }
  func.func @transform_0(%arg0: i32) -> (i32, i32, i32) {
    %c0_i32 = arith.constant 0 : i32
    %c0_i32_0 = arith.constant 0 : i32
    %c0_i32_1 = arith.constant 0 : i32
    return %arg0, %c0_i32, %c0_i32_0 : i32, i32, i32
  }
  func.func @transform_1(%arg0: i32) -> (i32, i32) {
    %c0_i32 = arith.constant 0 : i32
    %c0_i32_0 = arith.constant 0 : i32
    %c0_i32_1 = arith.constant 0 : i32
    return %c0_i32, %c0_i32_0 : i32, i32
  }
  func.func @transform_2(%arg0: i32) -> (i32, i32, i32) {
    %c0_i32 = arith.constant 0 : i32
    %c0_i32_0 = arith.constant 0 : i32
    %c0_i32_1 = arith.constant 0 : i32
    return %arg0, %c0_i32, %c0_i32_0 : i32, i32, i32
  }
  func.func @transform_3(%arg0: i32) -> (i32, i32, i32) {
    %c0_i32 = arith.constant 0 : i32
    %c0_i32_0 = arith.constant 0 : i32
    %c0_i32_1 = arith.constant 0 : i32
    return %arg0, %c0_i32, %c0_i32_0 : i32, i32, i32
  }
}

module attributes {stable_mosaic.version = 11 : i64} {
  func.func @_bn_relu_conv2_kernel(%arg0: i32, %arg1: memref<1x8x256xf32, #tpu.memory_space<vmem>>, %arg2: memref<8x2xf32, #tpu.memory_space<vmem>>, %arg3: memref<9x8x8xbf16, #tpu.memory_space<vmem>>, %arg4: memref<9x1x256xf32, #tpu.memory_space<vmem>>, %arg5: memref<1x8x256xf32, #tpu.memory_space<vmem>>, %arg6: memref<1x8x2xf32, #tpu.memory_space<vmem>>) attributes {dimension_semantics = [#tpu.dimension_semantics<parallel>], iteration_bounds = array<i64: 2>, scalar_prefetch = 0 : i64, scratch_operands = 0 : i64, tpu.core_type = #tpu.core_type<tc>, window_params = [{transform_indices = @transform_0, window_bounds = array<i64: 1, 8, 256>}, {pipeline_mode = #tpu.pipeline_mode<synchronous>, transform_indices = @transform_1, window_bounds = array<i64: 8, 2>}, {pipeline_mode = #tpu.pipeline_mode<synchronous>, transform_indices = @transform_2, window_bounds = array<i64: 9, 8, 8>}, {pipeline_mode = #tpu.pipeline_mode<synchronous>, transform_indices = @transform_3, window_bounds = array<i64: 9, 1, 256>}, {transform_indices = @transform_4, window_bounds = array<i64: 1, 8, 256>}, {transform_indices = @transform_5, window_bounds = array<i64: 1, 8, 2>}]} {
    %c0 = arith.constant 0 : index
    %c0_0 = arith.constant 0 : index
    %0 = vector.load %arg2[%c0, %c0_0] : memref<8x2xf32, #tpu.memory_space<vmem>>, vector<8x1xf32>
    %c0_1 = arith.constant 0 : index
    %c1 = arith.constant 1 : index
    %1 = vector.load %arg2[%c0_1, %c1] : memref<8x2xf32, #tpu.memory_space<vmem>>, vector<8x1xf32>
    %c0_2 = arith.constant 0 : index
    %c0_3 = arith.constant 0 : index
    %c0_4 = arith.constant 0 : index
    %2 = vector.load %arg1[%c0_2, %c0_3, %c0_4] : memref<1x8x256xf32, #tpu.memory_space<vmem>>, vector<1x8x256xf32>
    %3 = vector.shape_cast %2 : vector<1x8x256xf32> to vector<8x256xf32>
    %4 = vector.broadcast %0 : vector<8x1xf32> to vector<8x256xf32>
    %5 = arith.mulf %3, %4 : vector<8x256xf32>
    %6 = vector.broadcast %1 : vector<8x1xf32> to vector<8x256xf32>
    %7 = arith.addf %5, %6 : vector<8x256xf32>
    %cst = arith.constant 0.000000e+00 : f32
    %8 = vector.broadcast %cst : f32 to vector<8x256xf32>
    %9 = arith.maximumf %7, %8 : vector<8x256xf32>
    %c4 = arith.constant 4 : index
    %c0_5 = arith.constant 0 : index
    %c0_6 = arith.constant 0 : index
    %10 = vector.load %arg3[%c4, %c0_5, %c0_6] : memref<9x8x8xbf16, #tpu.memory_space<vmem>>, vector<1x8x8xbf16>
    %11 = vector.shape_cast %10 : vector<1x8x8xbf16> to vector<8x8xbf16>
    %12 = arith.truncf %9 : vector<8x256xf32> to vector<8x256xbf16>
    %cst_7 = arith.constant dense<0.000000e+00> : vector<8x256xf32>
    %13 = tpu.matmul %11, %12, %cst_7 {dimension_numbers = #tpu.dot_dimension_numbers<[1], [0], [0], [1], [0, 0, 1, 1], [], []>} : vector<8x8xbf16>, vector<8x256xbf16>, vector<8x256xf32> -> vector<8x256xf32>
    %c17_i32 = arith.constant 17 : i32
    %14 = tpu.dynamic_rotate %9 by %c17_i32 dim 1 : vector<8x256xf32>, i32 -> vector<8x256xf32>
    %c0_8 = arith.constant 0 : index
    %c0_9 = arith.constant 0 : index
    %c0_10 = arith.constant 0 : index
    %15 = vector.load %arg4[%c0_8, %c0_9, %c0_10] : memref<9x1x256xf32, #tpu.memory_space<vmem>>, vector<1x1x256xf32>
    %16 = vector.shape_cast %15 : vector<1x1x256xf32> to vector<1x256xf32>
    %17 = vector.broadcast %16 : vector<1x256xf32> to vector<8x256xf32>
    %18 = arith.mulf %14, %17 : vector<8x256xf32>
    %c0_11 = arith.constant 0 : index
    %c0_12 = arith.constant 0 : index
    %c0_13 = arith.constant 0 : index
    %19 = vector.load %arg3[%c0_11, %c0_12, %c0_13] : memref<9x8x8xbf16, #tpu.memory_space<vmem>>, vector<1x8x8xbf16>
    %20 = vector.shape_cast %19 : vector<1x8x8xbf16> to vector<8x8xbf16>
    %21 = arith.truncf %18 : vector<8x256xf32> to vector<8x256xbf16>
    %cst_14 = arith.constant dense<0.000000e+00> : vector<8x256xf32>
    %22 = tpu.matmul %20, %21, %cst_14 {dimension_numbers = #tpu.dot_dimension_numbers<[1], [0], [0], [1], [0, 0, 1, 1], [], []>} : vector<8x8xbf16>, vector<8x256xbf16>, vector<8x256xf32> -> vector<8x256xf32>
    %23 = arith.addf %13, %22 : vector<8x256xf32>
    %c16_i32 = arith.constant 16 : i32
    %24 = tpu.dynamic_rotate %9 by %c16_i32 dim 1 : vector<8x256xf32>, i32 -> vector<8x256xf32>
    %c1_15 = arith.constant 1 : index
    %c0_16 = arith.constant 0 : index
    %c0_17 = arith.constant 0 : index
    %25 = vector.load %arg4[%c1_15, %c0_16, %c0_17] : memref<9x1x256xf32, #tpu.memory_space<vmem>>, vector<1x1x256xf32>
    %26 = vector.shape_cast %25 : vector<1x1x256xf32> to vector<1x256xf32>
    %27 = vector.broadcast %26 : vector<1x256xf32> to vector<8x256xf32>
    %28 = arith.mulf %24, %27 : vector<8x256xf32>
    %c1_18 = arith.constant 1 : index
    %c0_19 = arith.constant 0 : index
    %c0_20 = arith.constant 0 : index
    %29 = vector.load %arg3[%c1_18, %c0_19, %c0_20] : memref<9x8x8xbf16, #tpu.memory_space<vmem>>, vector<1x8x8xbf16>
    %30 = vector.shape_cast %29 : vector<1x8x8xbf16> to vector<8x8xbf16>
    %31 = arith.truncf %28 : vector<8x256xf32> to vector<8x256xbf16>
    %cst_21 = arith.constant dense<0.000000e+00> : vector<8x256xf32>
    %32 = tpu.matmul %30, %31, %cst_21 {dimension_numbers = #tpu.dot_dimension_numbers<[1], [0], [0], [1], [0, 0, 1, 1], [], []>} : vector<8x8xbf16>, vector<8x256xbf16>, vector<8x256xf32> -> vector<8x256xf32>
    %33 = arith.addf %23, %32 : vector<8x256xf32>
    %c15_i32 = arith.constant 15 : i32
    %34 = tpu.dynamic_rotate %9 by %c15_i32 dim 1 : vector<8x256xf32>, i32 -> vector<8x256xf32>
    %c2 = arith.constant 2 : index
    %c0_22 = arith.constant 0 : index
    %c0_23 = arith.constant 0 : index
    %35 = vector.load %arg4[%c2, %c0_22, %c0_23] : memref<9x1x256xf32, #tpu.memory_space<vmem>>, vector<1x1x256xf32>
    %36 = vector.shape_cast %35 : vector<1x1x256xf32> to vector<1x256xf32>
    %37 = vector.broadcast %36 : vector<1x256xf32> to vector<8x256xf32>
    %38 = arith.mulf %34, %37 : vector<8x256xf32>
    %c2_24 = arith.constant 2 : index
    %c0_25 = arith.constant 0 : index
    %c0_26 = arith.constant 0 : index
    %39 = vector.load %arg3[%c2_24, %c0_25, %c0_26] : memref<9x8x8xbf16, #tpu.memory_space<vmem>>, vector<1x8x8xbf16>
    %40 = vector.shape_cast %39 : vector<1x8x8xbf16> to vector<8x8xbf16>
    %41 = arith.truncf %38 : vector<8x256xf32> to vector<8x256xbf16>
    %cst_27 = arith.constant dense<0.000000e+00> : vector<8x256xf32>
    %42 = tpu.matmul %40, %41, %cst_27 {dimension_numbers = #tpu.dot_dimension_numbers<[1], [0], [0], [1], [0, 0, 1, 1], [], []>} : vector<8x8xbf16>, vector<8x256xbf16>, vector<8x256xf32> -> vector<8x256xf32>
    %43 = arith.addf %33, %42 : vector<8x256xf32>
    %c1_i32 = arith.constant 1 : i32
    %44 = tpu.dynamic_rotate %9 by %c1_i32 dim 1 : vector<8x256xf32>, i32 -> vector<8x256xf32>
    %c3 = arith.constant 3 : index
    %c0_28 = arith.constant 0 : index
    %c0_29 = arith.constant 0 : index
    %45 = vector.load %arg4[%c3, %c0_28, %c0_29] : memref<9x1x256xf32, #tpu.memory_space<vmem>>, vector<1x1x256xf32>
    %46 = vector.shape_cast %45 : vector<1x1x256xf32> to vector<1x256xf32>
    %47 = vector.broadcast %46 : vector<1x256xf32> to vector<8x256xf32>
    %48 = arith.mulf %44, %47 : vector<8x256xf32>
    %c3_30 = arith.constant 3 : index
    %c0_31 = arith.constant 0 : index
    %c0_32 = arith.constant 0 : index
    %49 = vector.load %arg3[%c3_30, %c0_31, %c0_32] : memref<9x8x8xbf16, #tpu.memory_space<vmem>>, vector<1x8x8xbf16>
    %50 = vector.shape_cast %49 : vector<1x8x8xbf16> to vector<8x8xbf16>
    %51 = arith.truncf %48 : vector<8x256xf32> to vector<8x256xbf16>
    %cst_33 = arith.constant dense<0.000000e+00> : vector<8x256xf32>
    %52 = tpu.matmul %50, %51, %cst_33 {dimension_numbers = #tpu.dot_dimension_numbers<[1], [0], [0], [1], [0, 0, 1, 1], [], []>} : vector<8x8xbf16>, vector<8x256xbf16>, vector<8x256xf32> -> vector<8x256xf32>
    %53 = arith.addf %43, %52 : vector<8x256xf32>
    %c255_i32 = arith.constant 255 : i32
    %54 = tpu.dynamic_rotate %9 by %c255_i32 dim 1 : vector<8x256xf32>, i32 -> vector<8x256xf32>
    %c5 = arith.constant 5 : index
    %c0_34 = arith.constant 0 : index
    %c0_35 = arith.constant 0 : index
    %55 = vector.load %arg4[%c5, %c0_34, %c0_35] : memref<9x1x256xf32, #tpu.memory_space<vmem>>, vector<1x1x256xf32>
    %56 = vector.shape_cast %55 : vector<1x1x256xf32> to vector<1x256xf32>
    %57 = vector.broadcast %56 : vector<1x256xf32> to vector<8x256xf32>
    %58 = arith.mulf %54, %57 : vector<8x256xf32>
    %c5_36 = arith.constant 5 : index
    %c0_37 = arith.constant 0 : index
    %c0_38 = arith.constant 0 : index
    %59 = vector.load %arg3[%c5_36, %c0_37, %c0_38] : memref<9x8x8xbf16, #tpu.memory_space<vmem>>, vector<1x8x8xbf16>
    %60 = vector.shape_cast %59 : vector<1x8x8xbf16> to vector<8x8xbf16>
    %61 = arith.truncf %58 : vector<8x256xf32> to vector<8x256xbf16>
    %cst_39 = arith.constant dense<0.000000e+00> : vector<8x256xf32>
    %62 = tpu.matmul %60, %61, %cst_39 {dimension_numbers = #tpu.dot_dimension_numbers<[1], [0], [0], [1], [0, 0, 1, 1], [], []>} : vector<8x8xbf16>, vector<8x256xbf16>, vector<8x256xf32> -> vector<8x256xf32>
    %63 = arith.addf %53, %62 : vector<8x256xf32>
    %c241_i32 = arith.constant 241 : i32
    %64 = tpu.dynamic_rotate %9 by %c241_i32 dim 1 : vector<8x256xf32>, i32 -> vector<8x256xf32>
    %c6 = arith.constant 6 : index
    %c0_40 = arith.constant 0 : index
    %c0_41 = arith.constant 0 : index
    %65 = vector.load %arg4[%c6, %c0_40, %c0_41] : memref<9x1x256xf32, #tpu.memory_space<vmem>>, vector<1x1x256xf32>
    %66 = vector.shape_cast %65 : vector<1x1x256xf32> to vector<1x256xf32>
    %67 = vector.broadcast %66 : vector<1x256xf32> to vector<8x256xf32>
    %68 = arith.mulf %64, %67 : vector<8x256xf32>
    %c6_42 = arith.constant 6 : index
    %c0_43 = arith.constant 0 : index
    %c0_44 = arith.constant 0 : index
    %69 = vector.load %arg3[%c6_42, %c0_43, %c0_44] : memref<9x8x8xbf16, #tpu.memory_space<vmem>>, vector<1x8x8xbf16>
    %70 = vector.shape_cast %69 : vector<1x8x8xbf16> to vector<8x8xbf16>
    %71 = arith.truncf %68 : vector<8x256xf32> to vector<8x256xbf16>
    %cst_45 = arith.constant dense<0.000000e+00> : vector<8x256xf32>
    %72 = tpu.matmul %70, %71, %cst_45 {dimension_numbers = #tpu.dot_dimension_numbers<[1], [0], [0], [1], [0, 0, 1, 1], [], []>} : vector<8x8xbf16>, vector<8x256xbf16>, vector<8x256xf32> -> vector<8x256xf32>
    %73 = arith.addf %63, %72 : vector<8x256xf32>
    %c240_i32 = arith.constant 240 : i32
    %74 = tpu.dynamic_rotate %9 by %c240_i32 dim 1 : vector<8x256xf32>, i32 -> vector<8x256xf32>
    %c7 = arith.constant 7 : index
    %c0_46 = arith.constant 0 : index
    %c0_47 = arith.constant 0 : index
    %75 = vector.load %arg4[%c7, %c0_46, %c0_47] : memref<9x1x256xf32, #tpu.memory_space<vmem>>, vector<1x1x256xf32>
    %76 = vector.shape_cast %75 : vector<1x1x256xf32> to vector<1x256xf32>
    %77 = vector.broadcast %76 : vector<1x256xf32> to vector<8x256xf32>
    %78 = arith.mulf %74, %77 : vector<8x256xf32>
    %c7_48 = arith.constant 7 : index
    %c0_49 = arith.constant 0 : index
    %c0_50 = arith.constant 0 : index
    %79 = vector.load %arg3[%c7_48, %c0_49, %c0_50] : memref<9x8x8xbf16, #tpu.memory_space<vmem>>, vector<1x8x8xbf16>
    %80 = vector.shape_cast %79 : vector<1x8x8xbf16> to vector<8x8xbf16>
    %81 = arith.truncf %78 : vector<8x256xf32> to vector<8x256xbf16>
    %cst_51 = arith.constant dense<0.000000e+00> : vector<8x256xf32>
    %82 = tpu.matmul %80, %81, %cst_51 {dimension_numbers = #tpu.dot_dimension_numbers<[1], [0], [0], [1], [0, 0, 1, 1], [], []>} : vector<8x8xbf16>, vector<8x256xbf16>, vector<8x256xf32> -> vector<8x256xf32>
    %83 = arith.addf %73, %82 : vector<8x256xf32>
    %c239_i32 = arith.constant 239 : i32
    %84 = tpu.dynamic_rotate %9 by %c239_i32 dim 1 : vector<8x256xf32>, i32 -> vector<8x256xf32>
    %c8 = arith.constant 8 : index
    %c0_52 = arith.constant 0 : index
    %c0_53 = arith.constant 0 : index
    %85 = vector.load %arg4[%c8, %c0_52, %c0_53] : memref<9x1x256xf32, #tpu.memory_space<vmem>>, vector<1x1x256xf32>
    %86 = vector.shape_cast %85 : vector<1x1x256xf32> to vector<1x256xf32>
    %87 = vector.broadcast %86 : vector<1x256xf32> to vector<8x256xf32>
    %88 = arith.mulf %84, %87 : vector<8x256xf32>
    %c8_54 = arith.constant 8 : index
    %c0_55 = arith.constant 0 : index
    %c0_56 = arith.constant 0 : index
    %89 = vector.load %arg3[%c8_54, %c0_55, %c0_56] : memref<9x8x8xbf16, #tpu.memory_space<vmem>>, vector<1x8x8xbf16>
    %90 = vector.shape_cast %89 : vector<1x8x8xbf16> to vector<8x8xbf16>
    %91 = arith.truncf %88 : vector<8x256xf32> to vector<8x256xbf16>
    %cst_57 = arith.constant dense<0.000000e+00> : vector<8x256xf32>
    %92 = tpu.matmul %90, %91, %cst_57 {dimension_numbers = #tpu.dot_dimension_numbers<[1], [0], [0], [1], [0, 0, 1, 1], [], []>} : vector<8x8xbf16>, vector<8x256xbf16>, vector<8x256xf32> -> vector<8x256xf32>
    %93 = arith.addf %83, %92 : vector<8x256xf32>
    %c0_58 = arith.constant 0 : index
    %c0_59 = arith.constant 0 : index
    %c0_60 = arith.constant 0 : index
    %94 = vector.load %arg5[%c0_58, %c0_59, %c0_60] : memref<1x8x256xf32, #tpu.memory_space<vmem>>, vector<1x8x256xf32>
    %95 = vector.shape_cast %94 : vector<1x8x256xf32> to vector<8x256xf32>
    %96 = vector.shape_cast %93 : vector<8x256xf32> to vector<1x8x256xf32>
    tpu.vector_store %arg5[%c0_58, %c0_59, %c0_60], %96 {strides = array<i32>} : memref<1x8x256xf32, #tpu.memory_space<vmem>>, vector<1x8x256xf32>,
    %cst_61 = arith.constant dense<0.000000e+00> : vector<8xf32>
    %97 = vector.multi_reduction <add>, %93, %cst_61 [1] : vector<8x256xf32> to vector<8xf32>
    %98 = vector.shape_cast %97 : vector<8xf32> to vector<8x1xf32>
    %c0_62 = arith.constant 0 : index
    %c0_63 = arith.constant 0 : index
    %c0_64 = arith.constant 0 : index
    %99 = vector.load %arg6[%c0_62, %c0_63, %c0_64] : memref<1x8x2xf32, #tpu.memory_space<vmem>>, vector<1x8x1xf32>
    %100 = vector.shape_cast %99 : vector<1x8x1xf32> to vector<8x1xf32>
    %101 = vector.shape_cast %98 : vector<8x1xf32> to vector<1x8x1xf32>
    tpu.vector_store %arg6[%c0_62, %c0_63, %c0_64], %101 {strides = array<i32>} : memref<1x8x2xf32, #tpu.memory_space<vmem>>, vector<1x8x1xf32>,
    %102 = arith.mulf %93, %93 : vector<8x256xf32>
    %cst_65 = arith.constant dense<0.000000e+00> : vector<8xf32>
    %103 = vector.multi_reduction <add>, %102, %cst_65 [1] : vector<8x256xf32> to vector<8xf32>
    %104 = vector.shape_cast %103 : vector<8xf32> to vector<8x1xf32>
    %c0_66 = arith.constant 0 : index
    %c0_67 = arith.constant 0 : index
    %c1_68 = arith.constant 1 : index
    %105 = vector.load %arg6[%c0_66, %c0_67, %c1_68] : memref<1x8x2xf32, #tpu.memory_space<vmem>>, vector<1x8x1xf32>
    %106 = vector.shape_cast %105 : vector<1x8x1xf32> to vector<8x1xf32>
    %107 = vector.shape_cast %104 : vector<8x1xf32> to vector<1x8x1xf32>
    tpu.vector_store %arg6[%c0_66, %c0_67, %c1_68], %107 {strides = array<i32>} : memref<1x8x2xf32, #tpu.memory_space<vmem>>, vector<1x8x1xf32>,
    return
  }
  func.func @transform_0(%arg0: i32) -> (i32, i32, i32) {
    %c0_i32 = arith.constant 0 : i32
    %c0_i32_0 = arith.constant 0 : i32
    %c0_i32_1 = arith.constant 0 : i32
    return %arg0, %c0_i32, %c0_i32_0 : i32, i32, i32
  }
  func.func @transform_1(%arg0: i32) -> (i32, i32) {
    %c0_i32 = arith.constant 0 : i32
    %c0_i32_0 = arith.constant 0 : i32
    %c0_i32_1 = arith.constant 0 : i32
    return %c0_i32, %c0_i32_0 : i32, i32
  }
  func.func @transform_2(%arg0: i32) -> (i32, i32, i32) {
    %c0_i32 = arith.constant 0 : i32
    %c0_i32_0 = arith.constant 0 : i32
    %c0_i32_1 = arith.constant 0 : i32
    %c0_i32_2 = arith.constant 0 : i32
    return %c0_i32, %c0_i32_0, %c0_i32_1 : i32, i32, i32
  }
  func.func @transform_3(%arg0: i32) -> (i32, i32, i32) {
    %c0_i32 = arith.constant 0 : i32
    %c0_i32_0 = arith.constant 0 : i32
    %c0_i32_1 = arith.constant 0 : i32
    %c0_i32_2 = arith.constant 0 : i32
    return %c0_i32, %c0_i32_0, %c0_i32_1 : i32, i32, i32
  }
  func.func @transform_4(%arg0: i32) -> (i32, i32, i32) {
    %c0_i32 = arith.constant 0 : i32
    %c0_i32_0 = arith.constant 0 : i32
    %c0_i32_1 = arith.constant 0 : i32
    return %arg0, %c0_i32, %c0_i32_0 : i32, i32, i32
  }
  func.func @transform_5(%arg0: i32) -> (i32, i32, i32) {
    %c0_i32 = arith.constant 0 : i32
    %c0_i32_0 = arith.constant 0 : i32
    %c0_i32_1 = arith.constant 0 : i32
    return %arg0, %c0_i32, %c0_i32_0 : i32, i32, i32
  }
}

</mosaic_0001>

<llo_original>
// kernel: residual_block_pallas.5
$region0: #{residual_block_pallas.5}
  #allocation0 [shape = 'u32[]', space=smem, size = 0x4, offset = 0x4, fixed_abs, tag = 'smem constant byte address 0x4 - core index']
  #allocation1 [shape = 'u32[144,128]{1,0:T(1,128)}', space=vmem, size = 0x12000, scoped, tag = 'internal scratch']
  %s0 = inlined_call_operand.vmem [shape: f32[2,8,256], index: 0, kind: input, shape index: {}]
  %s1 = inlined_call_operand.vmem [shape: f32[8,2], index: 1, kind: input, shape index: {}]
  %s2 = inlined_call_operand.vmem [shape: f32[2,8,256], index: 2, kind: input, shape index: {}]
  %s3 = inlined_call_operand.vmem [shape: f32[2,8,256], index: 3, kind: output, shape index: {}]
  %s4 = sld [smem:[#allocation0]]
  $region45: #{residual_block_pallas.5} parent=0
    _
  %s6 = ssub.s32 1, %s4
  %s7 = scalar_select 0, %s6, %s4
  loop: start=0, step=1, limit=4
  $region2: #{residual_block_pallas.5} parent=0 // loop_pre_header
    _
  $region3: #{residual_block_pallas.5} parent=0 // loop_header
    %s9 = sphi 0, %s13
    %p10 = scmp.ge.s32.totalorder %s9, 4
    %s19 = sphi 0, %s21
    %s22 = sphi 0, %s19
    %s23 = sphi 0, %s22
    %s39 = sphi 0, %s23
    %s43 = sphi 0, %s43
    %s45 = sphi 0, %s43
    %s46 = sphi 0, %s45
    %s60 = sphi 0, %s46
    %s66 = sphi 0, %s68
    %s69 = sphi 0, %s66
    %s70 = sphi 0, %s69
    %s86 = sphi 0, %s70
    %s92 = sphi 0, %s94
    %s95 = sphi 0, %s92
    %s96 = sphi 0, %s95
    %s112 = sphi 0, %s96
  $region4: #{residual_block_pallas.5} parent=0 // loop_header_branch
    %12 = sbr.rel (%p10) target = $region8
  $region5: #{residual_block_pallas.5} parent=0 // loop_body
    %s14 = ssub.s32 %s9, 1
    %s15 = ssub.s32 %s9, 2
    %s16 = sadd.s32 %s9, 1
    %s17 = ssub.s32 %s9, %s16
    %p18 = scmp.eq.s32.totalorder %s17, 0
    %s20 = sadd.s32 %s19, 1
    %s21 = scalar_select %p18, %s19, %s20
    %p24 = pneg %p18
    %p25 = scmp.eq.s32.totalorder %s9, 1
    %p26 = por %p24, %p25
    %p27 = scmp.ne.s32.totalorder %s19, %s22
    %p28 = scmp.eq.s32.totalorder %s9, 0
    %p29 = por %p27, %p28
    %p30 = scmp.ne.s32.totalorder %s19, %s22
    %p31 = scmp.eq.s32.totalorder %s14, 1
    %p32 = por %p30, %p31
    %p33 = scmp.ne.s32.totalorder %s22, %s23
    %p34 = scmp.eq.s32.totalorder %s14, 0
    %p35 = por %p33, %p34
    %p36 = scmp.ne.s32.totalorder %s22, %s23
    %p37 = scmp.eq.s32.totalorder %s15, 1
    %p38 = por %p36, %p37
    %p40 = scmp.ne.s32.totalorder %s23, %s39
    %p41 = scmp.eq.s32.totalorder %s15, 0
    %p42 = por %p40, %p41
    %s44 = sadd.s32 %s43, 1
    %p47 = scmp.eq.s32.totalorder %s9, 1
    %p48 = scmp.ne.s32.totalorder %s43, %s45
    %p49 = scmp.eq.s32.totalorder %s9, 0
    %p50 = por %p48, %p49
    %p51 = scmp.ne.s32.totalorder %s43, %s45
    %p52 = scmp.eq.s32.totalorder %s14, 1
    %p53 = por %p51, %p52
    %p54 = scmp.ne.s32.totalorder %s45, %s46
    %p55 = scmp.eq.s32.totalorder %s14, 0
    %p56 = por %p54, %p55
    %p57 = scmp.ne.s32.totalorder %s45, %s46
    %p58 = scmp.eq.s32.totalorder %s15, 1
    %p59 = por %p57, %p58
    %p61 = scmp.ne.s32.totalorder %s46, %s60
    %p62 = scmp.eq.s32.totalorder %s15, 0
    %p63 = por %p61, %p62
    %s64 = ssub.s32 %s9, %s16
    %p65 = scmp.eq.s32.totalorder %s64, 0
    %s67 = sadd.s32 %s66, 1
    %s68 = scalar_select %p65, %s66, %s67
    %p71 = pneg %p65
    %p72 = scmp.eq.s32.totalorder %s9, 1
    %p73 = por %p71, %p72
    %p74 = scmp.ne.s32.totalorder %s66, %s69
    %p75 = scmp.eq.s32.totalorder %s9, 0
    %p76 = por %p74, %p75
    %p77 = scmp.ne.s32.totalorder %s66, %s69
    %p78 = scmp.eq.s32.totalorder %s14, 1
    %p79 = por %p77, %p78
    %p80 = scmp.ne.s32.totalorder %s69, %s70
    %p81 = scmp.eq.s32.totalorder %s14, 0
    %p82 = por %p80, %p81
    %p83 = scmp.ne.s32.totalorder %s69, %s70
    %p84 = scmp.eq.s32.totalorder %s15, 1
    %p85 = por %p83, %p84
    %p87 = scmp.ne.s32.totalorder %s70, %s86
    %p88 = scmp.eq.s32.totalorder %s15, 0
    %p89 = por %p87, %p88
    %s90 = ssub.s32 %s9, %s16
    %p91 = scmp.eq.s32.totalorder %s90, 0
    %s93 = sadd.s32 %s92, 1
    %s94 = scalar_select %p91, %s92, %s93
    %p97 = pneg %p91
    %p98 = scmp.eq.s32.totalorder %s9, 1
    %p99 = por %p97, %p98
    %p100 = scmp.ne.s32.totalorder %s92, %s95
    %p101 = scmp.eq.s32.totalorder %s9, 0
    %p102 = por %p100, %p101
    %p103 = scmp.ne.s32.totalorder %s92, %s95
    %p104 = scmp.eq.s32.totalorder %s14, 1
    %p105 = por %p103, %p104
    %p106 = scmp.ne.s32.totalorder %s95, %s96
    %p107 = scmp.eq.s32.totalorder %s14, 0
    %p108 = por %p106, %p107
    %p109 = scmp.ne.s32.totalorder %s95, %s96
    %p110 = scmp.eq.s32.totalorder %s15, 1
    %p111 = por %p109, %p110
    %p113 = scmp.ne.s32.totalorder %s96, %s112
    %p114 = scmp.eq.s32.totalorder %s15, 0
    %p115 = por %p113, %p114
    %p116 = scmp.le.s32.totalorder 1, %s9
    %p117 = scmp.lt.s32.totalorder %s9, 3
    %p118 = pnand %p116, %p117
    %p119 = pneg %p118
    // Predicated region
    $region9: #{residual_block_pallas.5} parent=5 // pred_check
      _
    $region10: #{residual_block_pallas.5} parent=5 // pred_check_branch
      %121 = sbr.rel (%p118) target = $region12
    $region11: #{residual_block_pallas.5} parent=5 // pred_region
      %s122 = ssub.s32 %s9, 1
      // Predicated region
      $region13: #{residual_block_pallas.5} parent=11 // pred_check
        %p123 = pneg %p56
      $region14: #{residual_block_pallas.5} parent=11 // pred_check_branch
        %125 = sbr.rel (%p123) target = $region16
      $region15: #{residual_block_pallas.5} parent=11 // pred_region
        _
      $region16: #{residual_block_pallas.5} parent=11 // pred_fallthru
        _
    $region12: #{residual_block_pallas.5} parent=5 // pred_fallthru
      _
    %p126 = scmp.lt.s32.totalorder %s9, 2
    // Predicated region
    $region17: #{residual_block_pallas.5} parent=5 // pred_check
      %p127 = pneg %p126
    $region18: #{residual_block_pallas.5} parent=5 // pred_check_branch
      %129 = sbr.rel (%p127) target = $region20
    $region19: #{residual_block_pallas.5} parent=5 // pred_region
      // Predicated region
      $region21: #{residual_block_pallas.5} parent=19 // pred_check
        %p130 = pneg %p29
      $region22: #{residual_block_pallas.5} parent=19 // pred_check_branch
        %132 = sbr.rel (%p130) target = $region24
      $region23: #{residual_block_pallas.5} parent=19 // pred_region
        %p133 = scmp.lt.s32.totalorder %s9, 1
        %s134 = scalar_select %p133, %s9, 1
        %s135 = smul.addr %s134, 2
        %s136 = smul.addr %s135, 8
        %s137 = scalar_lea.vmem %s0, %s136
      $region24: #{residual_block_pallas.5} parent=19 // pred_fallthru
        _
      // Predicated region
      $region25: #{residual_block_pallas.5} parent=19 // pred_check
        %p138 = pneg %p76
      $region26: #{residual_block_pallas.5} parent=19 // pred_check_branch
        %140 = sbr.rel (%p138) target = $region28
      $region27: #{residual_block_pallas.5} parent=19 // pred_region
        %p141 = scmp.lt.s32.totalorder %s9, 1
        %s142 = scalar_select %p141, %s9, 1
        %s143 = smul.addr %s142, 2
        %s144 = smul.addr %s143, 8
        %s145 = scalar_lea.vmem %s2, %s144
      $region28: #{residual_block_pallas.5} parent=19 // pred_fallthru
        _
    $region20: #{residual_block_pallas.5} parent=5 // pred_fallthru
      _
    %p146 = scmp.le.s32.totalorder 1, %s9
    %p147 = scmp.lt.s32.totalorder %s9, 3
    %p148 = pnand %p146, %p147
    %p149 = pneg %p148
    // Predicated region
    $region29: #{residual_block_pallas.5} parent=5 // pred_check
      _
    $region30: #{residual_block_pallas.5} parent=5 // pred_check_branch
      %151 = sbr.rel (%p148) target = $region32
    $region31: #{residual_block_pallas.5} parent=5 // pred_region
      %s152 = ssub.s32 %s9, 1
      %p153 = scmp.lt.s32.totalorder %s14, 1
      %s154 = scalar_select %p153, %s14, 1
      %s155 = smul.addr %s154, 2
      %s156 = smul.addr %s155, 8
      %s157 = scalar_lea.vmem %s0, %s156
      %p158 = pneg %p35
      %p159 = pneg %p32
      %p160 = pneg %p56
      %p161 = pneg %p53
      %p162 = scmp.lt.s32.totalorder %s14, 1
      %s163 = scalar_select %p162, %s14, 1
      %s164 = smul.addr %s163, 2
      %s165 = smul.addr %s164, 8
      %s166 = scalar_lea.vmem %s2, %s165
      %p167 = pneg %p82
      %p168 = pneg %p79
      %p169 = pneg %p108
      %p170 = pneg %p105
      %p171 = scmp.lt.s32.totalorder %s14, 1
      %s172 = scalar_select %p171, %s14, 1
      %s173 = smul.addr %s172, 2
      %s174 = smul.addr %s173, 8
      %s175 = scalar_lea.vmem %s3, %s174
      %p176 = scmp.lt.s32.totalorder %s14, 1
      %s177 = scalar_select %p176, %s14, 1
      %s178 = smul.addr %s177, 2
      %s179 = smul.addr %s178, 8
      %s180 = scalar_lea.vmem %s0, %s179
      %p181 = scmp.lt.s32.totalorder %s14, 1
      %s182 = scalar_select %p181, %s14, 1
      %s183 = smul.addr %s182, 2
      %s184 = smul.addr %s183, 8
      %s185 = scalar_lea.vmem %s2, %s184
      %p186 = scmp.lt.s32.totalorder %s14, 1
      %s187 = scalar_select %p186, %s14, 1
      %s188 = smul.addr %s187, 2
      %s189 = smul.addr %s188, 8
      %s190 = scalar_lea.vmem %s3, %s189
      %v191 = vld [vmem:[%s1] sm:$0xff]
      %v192 = vld [vmem:[%s185] sm:$0xff]
      %v193 = vld [vmem:[%s185 + $0x8] sm:$0xff]
      %v194 = vld [vmem:[%s180] sm:$0xff]
      %v195 = vld [vmem:[%s180 + $0x8] sm:$0xff]
      %197 = vset.pattern.permute.xlu0 0
      %198 = vperm.xlu0 %197, %v191
      %v199 = vpop.permute.xlu0 %198
      %v201 = vmul.f32 %v194, %v199
      %v202 = vmul.f32 %v195, %v199
      %203 = vset.pattern.permute.xlu0 1
      %204 = vperm.xlu0 %203, %v191
      %v205 = vpop.permute.xlu0 %204
      %v207 = vadd.f32 %v201, %v205
      %v208 = vadd.f32 %v202, %v205
      %v209 = vadd.f32 %v192, %v207
      %v210 = vadd.f32 %v193, %v208
      %211 = vst [vmem:[%s190] sm:$0xff] %v209
      %212 = vst [vmem:[%s190 + $0x8] sm:$0xff] %v210
      %p213 = scmp.lt.s32.totalorder %s14, 1
      %s214 = scalar_select %p213, %s14, 1
      %s215 = smul.addr %s214, 2
      %s216 = smul.addr %s215, 8
      %s217 = scalar_lea.vmem %s3, %s216
      // Predicated region
      $region33: #{residual_block_pallas.5} parent=31 // pred_check
        %p218 = pneg %p105
      $region34: #{residual_block_pallas.5} parent=31 // pred_check_branch
        %220 = sbr.rel (%p218) target = $region36
      $region35: #{residual_block_pallas.5} parent=31 // pred_region
        _
      $region36: #{residual_block_pallas.5} parent=31 // pred_fallthru
        _
    $region32: #{residual_block_pallas.5} parent=5 // pred_fallthru
      _
    %p221 = scmp.le.s32.totalorder 2, %s9
    // Predicated region
    $region37: #{residual_block_pallas.5} parent=5 // pred_check
      %p222 = pneg %p221
    $region38: #{residual_block_pallas.5} parent=5 // pred_check_branch
      %224 = sbr.rel (%p222) target = $region40
    $region39: #{residual_block_pallas.5} parent=5 // pred_region
      %s225 = ssub.s32 %s9, 2
      // Predicated region
      $region41: #{residual_block_pallas.5} parent=39 // pred_check
        %p226 = pneg %p111
      $region42: #{residual_block_pallas.5} parent=39 // pred_check_branch
        %228 = sbr.rel (%p226) target = $region44
      $region43: #{residual_block_pallas.5} parent=39 // pred_region
        %p229 = scmp.lt.s32.totalorder %s15, 1
        %s230 = scalar_select %p229, %s15, 1
        %s231 = smul.addr %s230, 2
        %s232 = smul.addr %s231, 8
        %s233 = scalar_lea.vmem %s3, %s232
      $region44: #{residual_block_pallas.5} parent=39 // pred_fallthru
        _
    $region40: #{residual_block_pallas.5} parent=5 // pred_fallthru
      _
  $region6: #{residual_block_pallas.5} parent=0 // loop_footer
    %s13 = sadd.s32 1, %s9
  $region7: #{residual_block_pallas.5} parent=0 // loop_footer_branch
    %8 = sbr.rel target = $region3
  $region8: #{residual_block_pallas.5} parent=0 // loop_exit
    _

// kernel: residual_block_pallas.4
$region0: #{residual_block_pallas.4}
  #allocation0 [shape = 'u32[]', space=smem, size = 0x4, offset = 0x4, fixed_abs, tag = 'smem constant byte address 0x4 - core index']
  #allocation1 [shape = 'u32[144,128]{1,0:T(1,128)}', space=vmem, size = 0x12000, scoped, tag = 'internal scratch']
  %s0 = inlined_call_operand.vmem [shape: f32[2,8,256], index: 0, kind: input, shape index: {}]
  %s1 = inlined_call_operand.vmem [shape: f32[8,2], index: 1, kind: input, shape index: {}]
  %s2 = inlined_call_operand.vmem [shape: bf16[9,8,8], index: 2, kind: input, shape index: {}]
  %s3 = inlined_call_operand.vmem [shape: f32[9,1,256], index: 3, kind: input, shape index: {}]
  %s4 = inlined_call_operand.vmem [shape: f32[2,8,256], index: 4, kind: output, shape index: {0}]
  %s5 = inlined_call_operand.vmem [shape: f32[2,8,2], index: 5, kind: output, shape index: {1}]
  %6 = xla_tuple %s4, %s5
  %s7 = sld [smem:[#allocation0]]
  $region57: #{residual_block_pallas.4} parent=0
    _
  %s9 = ssub.s32 1, %s7
  %s10 = scalar_select 0, %s9, %s7
  loop: start=0, step=1, limit=4
  $region2: #{residual_block_pallas.4} parent=0 // loop_pre_header
    _
  $region3: #{residual_block_pallas.4} parent=0 // loop_header
    %s12 = sphi 0, %s16
    %p13 = scmp.ge.s32.totalorder %s12, 4
    %s22 = sphi 0, %s24
    %s25 = sphi 0, %s22
    %s26 = sphi 0, %s25
    %s42 = sphi 0, %s26
    %s46 = sphi 0, %s46
    %s48 = sphi 0, %s46
    %s49 = sphi 0, %s48
    %s63 = sphi 0, %s49
    %s67 = sphi 0, %s67
    %s69 = sphi 0, %s67
    %s70 = sphi 0, %s69
    %s84 = sphi 0, %s70
    %s88 = sphi 0, %s88
    %s90 = sphi 0, %s88
    %s91 = sphi 0, %s90
    %s105 = sphi 0, %s91
    %s111 = sphi 0, %s113
    %s114 = sphi 0, %s111
    %s115 = sphi 0, %s114
    %s131 = sphi 0, %s115
    %s137 = sphi 0, %s139
    %s140 = sphi 0, %s137
    %s141 = sphi 0, %s140
    %s157 = sphi 0, %s141
  $region4: #{residual_block_pallas.4} parent=0 // loop_header_branch
    %15 = sbr.rel (%p13) target = $region8
  $region5: #{residual_block_pallas.4} parent=0 // loop_body
    %s17 = ssub.s32 %s12, 1
    %s18 = ssub.s32 %s12, 2
    %s19 = sadd.s32 %s12, 1
    %s20 = ssub.s32 %s12, %s19
    %p21 = scmp.eq.s32.totalorder %s20, 0
    %s23 = sadd.s32 %s22, 1
    %s24 = scalar_select %p21, %s22, %s23
    %p27 = pneg %p21
    %p28 = scmp.eq.s32.totalorder %s12, 1
    %p29 = por %p27, %p28
    %p30 = scmp.ne.s32.totalorder %s22, %s25
    %p31 = scmp.eq.s32.totalorder %s12, 0
    %p32 = por %p30, %p31
    %p33 = scmp.ne.s32.totalorder %s22, %s25
    %p34 = scmp.eq.s32.totalorder %s17, 1
    %p35 = por %p33, %p34
    %p36 = scmp.ne.s32.totalorder %s25, %s26
    %p37 = scmp.eq.s32.totalorder %s17, 0
    %p38 = por %p36, %p37
    %p39 = scmp.ne.s32.totalorder %s25, %s26
    %p40 = scmp.eq.s32.totalorder %s18, 1
    %p41 = por %p39, %p40
    %p43 = scmp.ne.s32.totalorder %s26, %s42
    %p44 = scmp.eq.s32.totalorder %s18, 0
    %p45 = por %p43, %p44
    %s47 = sadd.s32 %s46, 1
    %p50 = scmp.eq.s32.totalorder %s12, 1
    %p51 = scmp.ne.s32.totalorder %s46, %s48
    %p52 = scmp.eq.s32.totalorder %s12, 0
    %p53 = por %p51, %p52
    %p54 = scmp.ne.s32.totalorder %s46, %s48
    %p55 = scmp.eq.s32.totalorder %s17, 1
    %p56 = por %p54, %p55
    %p57 = scmp.ne.s32.totalorder %s48, %s49
    %p58 = scmp.eq.s32.totalorder %s17, 0
    %p59 = por %p57, %p58
    %p60 = scmp.ne.s32.totalorder %s48, %s49
    %p61 = scmp.eq.s32.totalorder %s18, 1
    %p62 = por %p60, %p61
    %p64 = scmp.ne.s32.totalorder %s49, %s63
    %p65 = scmp.eq.s32.totalorder %s18, 0
    %p66 = por %p64, %p65
    %s68 = sadd.s32 %s67, 1
    %p71 = scmp.eq.s32.totalorder %s12, 1
    %p72 = scmp.ne.s32.totalorder %s67, %s69
    %p73 = scmp.eq.s32.totalorder %s12, 0
    %p74 = por %p72, %p73
    %p75 = scmp.ne.s32.totalorder %s67, %s69
    %p76 = scmp.eq.s32.totalorder %s17, 1
    %p77 = por %p75, %p76
    %p78 = scmp.ne.s32.totalorder %s69, %s70
    %p79 = scmp.eq.s32.totalorder %s17, 0
    %p80 = por %p78, %p79
    %p81 = scmp.ne.s32.totalorder %s69, %s70
    %p82 = scmp.eq.s32.totalorder %s18, 1
    %p83 = por %p81, %p82
    %p85 = scmp.ne.s32.totalorder %s70, %s84
    %p86 = scmp.eq.s32.totalorder %s18, 0
    %p87 = por %p85, %p86
    %s89 = sadd.s32 %s88, 1
    %p92 = scmp.eq.s32.totalorder %s12, 1
    %p93 = scmp.ne.s32.totalorder %s88, %s90
    %p94 = scmp.eq.s32.totalorder %s12, 0
    %p95 = por %p93, %p94
    %p96 = scmp.ne.s32.totalorder %s88, %s90
    %p97 = scmp.eq.s32.totalorder %s17, 1
    %p98 = por %p96, %p97
    %p99 = scmp.ne.s32.totalorder %s90, %s91
    %p100 = scmp.eq.s32.totalorder %s17, 0
    %p101 = por %p99, %p100
    %p102 = scmp.ne.s32.totalorder %s90, %s91
    %p103 = scmp.eq.s32.totalorder %s18, 1
    %p104 = por %p102, %p103
    %p106 = scmp.ne.s32.totalorder %s91, %s105
    %p107 = scmp.eq.s32.totalorder %s18, 0
    %p108 = por %p106, %p107
    %s109 = ssub.s32 %s12, %s19
    %p110 = scmp.eq.s32.totalorder %s109, 0
    %s112 = sadd.s32 %s111, 1
    %s113 = scalar_select %p110, %s111, %s112
    %p116 = pneg %p110
    %p117 = scmp.eq.s32.totalorder %s12, 1
    %p118 = por %p116, %p117
    %p119 = scmp.ne.s32.totalorder %s111, %s114
    %p120 = scmp.eq.s32.totalorder %s12, 0
    %p121 = por %p119, %p120
    %p122 = scmp.ne.s32.totalorder %s111, %s114
    %p123 = scmp.eq.s32.totalorder %s17, 1
    %p124 = por %p122, %p123
    %p125 = scmp.ne.s32.totalorder %s114, %s115
    %p126 = scmp.eq.s32.totalorder %s17, 0
    %p127 = por %p125, %p126
    %p128 = scmp.ne.s32.totalorder %s114, %s115
    %p129 = scmp.eq.s32.totalorder %s18, 1
    %p130 = por %p128, %p129
    %p132 = scmp.ne.s32.totalorder %s115, %s131
    %p133 = scmp.eq.s32.totalorder %s18, 0
    %p134 = por %p132, %p133
    %s135 = ssub.s32 %s12, %s19
    %p136 = scmp.eq.s32.totalorder %s135, 0
    %s138 = sadd.s32 %s137, 1
    %s139 = scalar_select %p136, %s137, %s138
    %p142 = pneg %p136
    %p143 = scmp.eq.s32.totalorder %s12, 1
    %p144 = por %p142, %p143
    %p145 = scmp.ne.s32.totalorder %s137, %s140
    %p146 = scmp.eq.s32.totalorder %s12, 0
    %p147 = por %p145, %p146
    %p148 = scmp.ne.s32.totalorder %s137, %s140
    %p149 = scmp.eq.s32.totalorder %s17, 1
    %p150 = por %p148, %p149
    %p151 = scmp.ne.s32.totalorder %s140, %s141
    %p152 = scmp.eq.s32.totalorder %s17, 0
    %p153 = por %p151, %p152
    %p154 = scmp.ne.s32.totalorder %s140, %s141
    %p155 = scmp.eq.s32.totalorder %s18, 1
    %p156 = por %p154, %p155
    %p158 = scmp.ne.s32.totalorder %s141, %s157
    %p159 = scmp.eq.s32.totalorder %s18, 0
    %p160 = por %p158, %p159
    %p161 = scmp.le.s32.totalorder 1, %s12
    %p162 = scmp.lt.s32.totalorder %s12, 3
    %p163 = pnand %p161, %p162
    %p164 = pneg %p163
    // Predicated region
    $region9: #{residual_block_pallas.4} parent=5 // pred_check
      _
    $region10: #{residual_block_pallas.4} parent=5 // pred_check_branch
      %166 = sbr.rel (%p163) target = $region12
    $region11: #{residual_block_pallas.4} parent=5 // pred_region
      %s167 = ssub.s32 %s12, 1
      // Predicated region
      $region13: #{residual_block_pallas.4} parent=11 // pred_check
        %p168 = pneg %p59
      $region14: #{residual_block_pallas.4} parent=11 // pred_check_branch
        %170 = sbr.rel (%p168) target = $region16
      $region15: #{residual_block_pallas.4} parent=11 // pred_region
        _
      $region16: #{residual_block_pallas.4} parent=11 // pred_fallthru
        _
      // Predicated region
      $region17: #{residual_block_pallas.4} parent=11 // pred_check
        %p171 = pneg %p80
      $region18: #{residual_block_pallas.4} parent=11 // pred_check_branch
        %173 = sbr.rel (%p171) target = $region20
      $region19: #{residual_block_pallas.4} parent=11 // pred_region
        _
      $region20: #{residual_block_pallas.4} parent=11 // pred_fallthru
        _
      // Predicated region
      $region21: #{residual_block_pallas.4} parent=11 // pred_check
        %p174 = pneg %p101
      $region22: #{residual_block_pallas.4} parent=11 // pred_check_branch
        %176 = sbr.rel (%p174) target = $region24
      $region23: #{residual_block_pallas.4} parent=11 // pred_region
        _
      $region24: #{residual_block_pallas.4} parent=11 // pred_fallthru
        _
    $region12: #{residual_block_pallas.4} parent=5 // pred_fallthru
      _
    %p177 = scmp.lt.s32.totalorder %s12, 2
    // Predicated region
    $region25: #{residual_block_pallas.4} parent=5 // pred_check
      %p178 = pneg %p177
    $region26: #{residual_block_pallas.4} parent=5 // pred_check_branch
      %180 = sbr.rel (%p178) target = $region28
    $region27: #{residual_block_pallas.4} parent=5 // pred_region
      // Predicated region
      $region29: #{residual_block_pallas.4} parent=27 // pred_check
        %p181 = pneg %p32
      $region30: #{residual_block_pallas.4} parent=27 // pred_check_branch
        %183 = sbr.rel (%p181) target = $region32
      $region31: #{residual_block_pallas.4} parent=27 // pred_region
        %p184 = scmp.lt.s32.totalorder %s12, 1
        %s185 = scalar_select %p184, %s12, 1
        %s186 = smul.addr %s185, 2
        %s187 = smul.addr %s186, 8
        %s188 = scalar_lea.vmem %s0, %s187
      $region32: #{residual_block_pallas.4} parent=27 // pred_fallthru
        _
    $region28: #{residual_block_pallas.4} parent=5 // pred_fallthru
      _
    %p189 = scmp.le.s32.totalorder 1, %s12
    %p190 = scmp.lt.s32.totalorder %s12, 3
    %p191 = pnand %p189, %p190
    %p192 = pneg %p191
    // Predicated region
    $region33: #{residual_block_pallas.4} parent=5 // pred_check
      _
    $region34: #{residual_block_pallas.4} parent=5 // pred_check_branch
      %194 = sbr.rel (%p191) target = $region36
    $region35: #{residual_block_pallas.4} parent=5 // pred_region
      %s195 = ssub.s32 %s12, 1
      %p196 = scmp.lt.s32.totalorder %s17, 1
      %s197 = scalar_select %p196, %s17, 1
      %s198 = smul.addr %s197, 2
      %s199 = smul.addr %s198, 8
      %s200 = scalar_lea.vmem %s0, %s199
      %p201 = pneg %p38
      %p202 = pneg %p35
      %p203 = pneg %p59
      %p204 = pneg %p56
      %p205 = pneg %p80
      %p206 = pneg %p77
      %p207 = pneg %p101
      %p208 = pneg %p98
      %p209 = pneg %p127
      %p210 = pneg %p124
      %p211 = scmp.lt.s32.totalorder %s17, 1
      %s212 = scalar_select %p211, %s17, 1
      %s213 = smul.addr %s212, 2
      %s214 = smul.addr %s213, 8
      %s215 = scalar_lea.vmem %s4, %s214
      %p216 = pneg %p153
      %p217 = pneg %p150
      %p218 = scmp.lt.s32.totalorder %s17, 1
      %s219 = scalar_select %p218, %s17, 1
      %s220 = smul.addr %s219, 8
      %s221 = scalar_lea.vmem %s5, %s220
      %p222 = scmp.lt.s32.totalorder %s17, 1
      %s223 = scalar_select %p222, %s17, 1
      %s224 = smul.addr %s223, 2
      %s225 = smul.addr %s224, 8
      %s226 = scalar_lea.vmem %s0, %s225
      %p227 = scmp.lt.s32.totalorder %s17, 1
      %s228 = scalar_select %p227, %s17, 1
      %s229 = smul.addr %s228, 2
      %s230 = smul.addr %s229, 8
      %s231 = scalar_lea.vmem %s4, %s230
      %p232 = scmp.lt.s32.totalorder %s17, 1
      %s233 = scalar_select %p232, %s17, 1
      %s234 = smul.addr %s233, 8
      %s235 = scalar_lea.vmem %s5, %s234
      %v237 = vld [vmem:[%s1] sm:$0xff]
      %v238 = vld [vmem:[%s226] sm:$0xff]
      %v239 = vld [vmem:[%s226 + $0x8] sm:$0xff]
      %241 = vset.pattern.permute.xlu0 0
      %242 = vperm.xlu0 %241, %v237
      %v243 = vpop.permute.xlu0 %242
      %v245 = vmul.f32 %v238, %v243
      %v246 = vmul.f32 %v239, %v243
      %247 = vset.pattern.permute.xlu0 1
      %248 = vperm.xlu0 %247, %v237
      %v249 = vpop.permute.xlu0 %248
      %v251 = vadd.f32 %v245, %v249
      %v252 = vadd.f32 %v246, %v249
      %v253 = vmax.f32 %v251, 0.0
      %v254 = vmax.f32 %v252, 0.0
      %s255 = scalar_lea.vmem %s2, 16
      %v256 = vld [vmem:[%s255] sm:$0xf]
      %v257 = vpack.c.bf16 %v253, %v253
      %v258 = vpack.c.bf16 %v254, %v254
      %259 = vrot.lane.b32.xlu0 %v253, 17
      %v260 = vpop.permute.xlu0 %259
      %261 = vrot.lane.b32.xlu0 %v254, 17
      %v262 = vpop.permute.xlu0 %261
      %v263 = vlaneseq
      %v264 = vand.u32 %v263, 127
      %vm265 = vcmp.lt.s32.totalorder %v264, 17
      %v266 = vsel %vm265, %v260, %v262
      %v267 = vsel %vm265, %v262, %v260
      %v268 = vld [vmem:[%s3] sm:$0x3]
      %v270 = vlaneseq
      %v271 = vshrl.u32 %v270, 7
      %v272 = vsub.s32 0, %v271
      %v273 = vrot.slane %v268, %v272
      %v274 = vlaneseq
      %v275 = vshrl.u32 %v274, 7
      %v276 = vsub.s32 1, %v275
      %v277 = vrot.slane %v268, %v276
      %v280 = vmul.f32 %v267, %v273
      %v281 = vmul.f32 %v266, %v277
      %v282 = vld [vmem:[%s2] sm:$0xf]
      %v283 = vpack.c.bf16 %v280, %v280
      %v284 = vpack.c.bf16 %v281, %v281
      %vm285 = vcmask 64512
      %v287 = vsel %vm285, %v282, 0
      %vm289 = vcmask 1043456
      %v291 = vsel %vm289, %v283, 0
      %v294 = vsel %vm289, %v284, 0
      %296 = vmatprep.subr.bf16.mxu0 %v294
      %297 = vmatpush1.bf16.msra.mxu0 %v291
      %298 = vmatprep.subr.bf16.mxu0 0
      %299 = vmatpush1.bf16.msra.mxu0 0
      %300 = vmatprep.subr.bf16.mxu0 0
      %301 = vmatpush1.bf16.msra.mxu0 0
      %302 = vmatprep.subr.bf16.mxu0 0
      %303 = vmatpush1.bf16.msra.mxu0 0
      %304 = vmatprep.subr.bf16.mxu0 0
      %305 = vmatpush1.bf16.msra.mxu0 0
      %306 = vmatprep.subr.bf16.mxu0 0
      %307 = vmatpush1.bf16.msra.mxu0 0
      %308 = vmatprep.subr.bf16.mxu0 0
      %309 = vmatpush1.bf16.msra.mxu0 0
      %310 = vmatprep.subr.bf16.mxu0 0
      %311 = vmatpush1.bf16.msra.mxu0 0
      %312 = vmatprep.subr.bf16.mxu0 0
      %313 = vmatpush1.bf16.msra.mxu0 0
      %314 = vmatprep.subr.bf16.mxu0 0
      %315 = vmatpush1.bf16.msra.mxu0 0
      %316 = vmatprep.subr.bf16.mxu0 0
      %317 = vmatpush1.bf16.msra.mxu0 0
      %318 = vmatprep.subr.bf16.mxu0 0
      %319 = vmatpush1.bf16.msra.mxu0 0
      %320 = vmatprep.subr.bf16.mxu0 0
      %321 = vmatpush1.bf16.msra.mxu0 0
      %322 = vmatprep.subr.bf16.mxu0 0
      %323 = vmatpush1.bf16.msra.mxu0 0
      %324 = vmatprep.subr.bf16.mxu0 0
      %325 = vmatpush1.bf16.msra.mxu0 0
      %326 = vmatprep.subr.bf16.mxu0 0
      %327 = vmatpush1.bf16.msra.mxu0 0
      %328 = vmatprep.mubr.bf16.mxu0 0
      %329 = vmatmul.mubr.bf16.gmra.mrb[0].mxu0 %v287
      %v330 = vpop.f32.mrb[0].mxu0
      %v331 = vadd.f32 0.0, %v330
      %v332 = vpop.f32.mrb[0].mxu0
      %v333 = vadd.f32 0.0, %v332
      %v334 = vpop.f32.mrb[0].mxu0
      %v335 = vpop.f32.mrb[0].mxu0
      %336 = vdwg.mxu0
      %v338 = vsel %vm285, %v256, 0
      %v341 = vsel %vm289, %v257, 0
      %v344 = vsel %vm289, %v258, 0
      %346 = vmatprep.subr.bf16.mxu0 %v344
      %347 = vmatpush1.bf16.msra.mxu0 %v341
      %348 = vmatprep.subr.bf16.mxu0 0
      %349 = vmatpush1.bf16.msra.mxu0 0
      %350 = vmatprep.subr.bf16.mxu0 0
      %351 = vmatpush1.bf16.msra.mxu0 0
      %352 = vmatprep.subr.bf16.mxu0 0
      %353 = vmatpush1.bf16.msra.mxu0 0
      %354 = vmatprep.subr.bf16.mxu0 0
      %355 = vmatpush1.bf16.msra.mxu0 0
      %356 = vmatprep.subr.bf16.mxu0 0
      %357 = vmatpush1.bf16.msra.mxu0 0
      %358 = vmatprep.subr.bf16.mxu0 0
      %359 = vmatpush1.bf16.msra.mxu0 0
      %360 = vmatprep.subr.bf16.mxu0 0
      %361 = vmatpush1.bf16.msra.mxu0 0
      %362 = vmatprep.subr.bf16.mxu0 0
      %363 = vmatpush1.bf16.msra.mxu0 0
      %364 = vmatprep.subr.bf16.mxu0 0
      %365 = vmatpush1.bf16.msra.mxu0 0
      %366 = vmatprep.subr.bf16.mxu0 0
      %367 = vmatpush1.bf16.msra.mxu0 0
      %368 = vmatprep.subr.bf16.mxu0 0
      %369 = vmatpush1.bf16.msra.mxu0 0
      %370 = vmatprep.subr.bf16.mxu0 0
      %371 = vmatpush1.bf16.msra.mxu0 0
      %372 = vmatprep.subr.bf16.mxu0 0
      %373 = vmatpush1.bf16.msra.mxu0 0
      %374 = vmatprep.subr.bf16.mxu0 0
      %375 = vmatpush1.bf16.msra.mxu0 0
      %376 = vmatprep.subr.bf16.mxu0 0
      %377 = vmatpush1.bf16.msra.mxu0 0
      %378 = vmatprep.mubr.bf16.mxu0 0
      %379 = vmatmul.mubr.bf16.gmra.mrb[0].mxu0 %v338
      %v380 = vpop.f32.mrb[0].mxu0
      %v381 = vadd.f32 %v331, %v380
      %v382 = vpop.f32.mrb[0].mxu0
      %v383 = vadd.f32 %v333, %v382
      %v384 = vpop.f32.mrb[0].mxu0
      %v385 = vpop.f32.mrb[0].mxu0
      %386 = vdwg.mxu0
      %387 = vrot.lane.b32.xlu0 %v253, 16
      %v388 = vpop.permute.xlu0 %387
      %389 = vrot.lane.b32.xlu0 %v254, 16
      %v390 = vpop.permute.xlu0 %389
      %vm391 = vcmp.lt.s32.totalorder %v264, 16
      %v392 = vsel %vm391, %v388, %v390
      %v393 = vsel %vm391, %v390, %v388
      %s394 = scalar_lea.vmem %s3, 2
      %v395 = vld [vmem:[%s394] sm:$0x3]
      %v397 = vlaneseq
      %v398 = vshrl.u32 %v397, 7
      %v399 = vsub.s32 0, %v398
      %v400 = vrot.slane %v395, %v399
      %v401 = vlaneseq
      %v402 = vshrl.u32 %v401, 7
      %v403 = vsub.s32 1, %v402
      %v404 = vrot.slane %v395, %v403
      %v407 = vmul.f32 %v393, %v400
      %v408 = vmul.f32 %v392, %v404
      %s409 = scalar_lea.vmem %s2, 4
      %v410 = vld [vmem:[%s409] sm:$0xf]
      %v411 = vpack.c.bf16 %v407, %v407
      %v412 = vpack.c.bf16 %v408, %v408
      %v414 = vsel %vm285, %v410, 0
      %v417 = vsel %vm289, %v411, 0
      %v420 = vsel %vm289, %v412, 0
      %422 = vmatprep.subr.bf16.mxu0 %v420
      %423 = vmatpush1.bf16.msra.mxu0 %v417
      %424 = vmatprep.subr.bf16.mxu0 0
      %425 = vmatpush1.bf16.msra.mxu0 0
      %426 = vmatprep.subr.bf16.mxu0 0
      %427 = vmatpush1.bf16.msra.mxu0 0
      %428 = vmatprep.subr.bf16.mxu0 0
      %429 = vmatpush1.bf16.msra.mxu0 0
      %430 = vmatprep.subr.bf16.mxu0 0
      %431 = vmatpush1.bf16.msra.mxu0 0
      %432 = vmatprep.subr.bf16.mxu0 0
      %433 = vmatpush1.bf16.msra.mxu0 0
      %434 = vmatprep.subr.bf16.mxu0 0
      %435 = vmatpush1.bf16.msra.mxu0 0
      %436 = vmatprep.subr.bf16.mxu0 0
      %437 = vmatpush1.bf16.msra.mxu0 0
      %438 = vmatprep.subr.bf16.mxu0 0
      %439 = vmatpush1.bf16.msra.mxu0 0
      %440 = vmatprep.subr.bf16.mxu0 0
      %441 = vmatpush1.bf16.msra.mxu0 0
      %442 = vmatprep.subr.bf16.mxu0 0
      %443 = vmatpush1.bf16.msra.mxu0 0
      %444 = vmatprep.subr.bf16.mxu0 0
      %445 = vmatpush1.bf16.msra.mxu0 0
      %446 = vmatprep.subr.bf16.mxu0 0
      %447 = vmatpush1.bf16.msra.mxu0 0
      %448 = vmatprep.subr.bf16.mxu0 0
      %449 = vmatpush1.bf16.msra.mxu0 0
      %450 = vmatprep.subr.bf16.mxu0 0
      %451 = vmatpush1.bf16.msra.mxu0 0
      %452 = vmatprep.subr.bf16.mxu0 0
      %453 = vmatpush1.bf16.msra.mxu0 0
      %454 = vmatprep.mubr.bf16.mxu0 0
      %455 = vmatmul.mubr.bf16.gmra.mrb[0].mxu0 %v414
      %v456 = vpop.f32.mrb[0].mxu0
      %v457 = vadd.f32 0.0, %v456
      %v458 = vpop.f32.mrb[0].mxu0
      %v459 = vadd.f32 0.0, %v458
      %v460 = vpop.f32.mrb[0].mxu0
      %v461 = vpop.f32.mrb[0].mxu0
      %462 = vdwg.mxu0
      %v463 = vadd.f32 %v381, %v457
      %v464 = vadd.f32 %v383, %v459
      %465 = vrot.lane.b32.xlu0 %v253, 15
      %v466 = vpop.permute.xlu0 %465
      %467 = vrot.lane.b32.xlu0 %v254, 15
      %v468 = vpop.permute.xlu0 %467
      %vm469 = vcmp.lt.s32.totalorder %v264, 15
      %v470 = vsel %vm469, %v466, %v468
      %v471 = vsel %vm469, %v468, %v466
      %s472 = scalar_lea.vmem %s3, 4
      %v473 = vld [vmem:[%s472] sm:$0x3]
      %v475 = vlaneseq
      %v476 = vshrl.u32 %v475, 7
      %v477 = vsub.s32 0, %v476
      %v478 = vrot.slane %v473, %v477
      %v479 = vlaneseq
      %v480 = vshrl.u32 %v479, 7
      %v481 = vsub.s32 1, %v480
      %v482 = vrot.slane %v473, %v481
      %v485 = vmul.f32 %v471, %v478
      %v486 = vmul.f32 %v470, %v482
      %s487 = scalar_lea.vmem %s2, 8
      %v488 = vld [vmem:[%s487] sm:$0xf]
      %v489 = vpack.c.bf16 %v485, %v485
      %v490 = vpack.c.bf16 %v486, %v486
      %v492 = vsel %vm285, %v488, 0
      %v495 = vsel %vm289, %v489, 0
      %v498 = vsel %vm289, %v490, 0
      %500 = vmatprep.subr.bf16.mxu0 %v498
      %501 = vmatpush1.bf16.msra.mxu0 %v495
      %502 = vmatprep.subr.bf16.mxu0 0
      %503 = vmatpush1.bf16.msra.mxu0 0
      %504 = vmatprep.subr.bf16.mxu0 0
      %505 = vmatpush1.bf16.msra.mxu0 0
      %506 = vmatprep.subr.bf16.mxu0 0
      %507 = vmatpush1.bf16.msra.mxu0 0
      %508 = vmatprep.subr.bf16.mxu0 0
      %509 = vmatpush1.bf16.msra.mxu0 0
      %510 = vmatprep.subr.bf16.mxu0 0
      %511 = vmatpush1.bf16.msra.mxu0 0
      %512 = vmatprep.subr.bf16.mxu0 0
      %513 = vmatpush1.bf16.msra.mxu0 0
      %514 = vmatprep.subr.bf16.mxu0 0
      %515 = vmatpush1.bf16.msra.mxu0 0
      %516 = vmatprep.subr.bf16.mxu0 0
      %517 = vmatpush1.bf16.msra.mxu0 0
      %518 = vmatprep.subr.bf16.mxu0 0
      %519 = vmatpush1.bf16.msra.mxu0 0
      %520 = vmatprep.subr.bf16.mxu0 0
      %521 = vmatpush1.bf16.msra.mxu0 0
      %522 = vmatprep.subr.bf16.mxu0 0
      %523 = vmatpush1.bf16.msra.mxu0 0
      %524 = vmatprep.subr.bf16.mxu0 0
      %525 = vmatpush1.bf16.msra.mxu0 0
      %526 = vmatprep.subr.bf16.mxu0 0
      %527 = vmatpush1.bf16.msra.mxu0 0
      %528 = vmatprep.subr.bf16.mxu0 0
      %529 = vmatpush1.bf16.msra.mxu0 0
      %530 = vmatprep.subr.bf16.mxu0 0
      %531 = vmatpush1.bf16.msra.mxu0 0
      %532 = vmatprep.mubr.bf16.mxu0 0
      %533 = vmatmul.mubr.bf16.gmra.mrb[0].mxu0 %v492
      %v534 = vpop.f32.mrb[0].mxu0
      %v535 = vadd.f32 0.0, %v534
      %v536 = vpop.f32.mrb[0].mxu0
      %v537 = vadd.f32 0.0, %v536
      %v538 = vpop.f32.mrb[0].mxu0
      %v539 = vpop.f32.mrb[0].mxu0
      %540 = vdwg.mxu0
      %v541 = vadd.f32 %v463, %v535
      %v542 = vadd.f32 %v464, %v537
      %543 = vrot.lane.b32.xlu0 %v253, 1
      %v544 = vpop.permute.xlu0 %543
      %545 = vrot.lane.b32.xlu0 %v254, 1
      %v546 = vpop.permute.xlu0 %545
      %vm547 = vcmp.lt.s32.totalorder %v264, 1
      %v548 = vsel %vm547, %v544, %v546
      %v549 = vsel %vm547, %v546, %v544
      %s550 = scalar_lea.vmem %s3, 6
      %v551 = vld [vmem:[%s550] sm:$0x3]
      %v553 = vlaneseq
      %v554 = vshrl.u32 %v553, 7
      %v555 = vsub.s32 0, %v554
      %v556 = vrot.slane %v551, %v555
      %v557 = vlaneseq
      %v558 = vshrl.u32 %v557, 7
      %v559 = vsub.s32 1, %v558
      %v560 = vrot.slane %v551, %v559
      %v563 = vmul.f32 %v549, %v556
      %v564 = vmul.f32 %v548, %v560
      %s565 = scalar_lea.vmem %s2, 12
      %v566 = vld [vmem:[%s565] sm:$0xf]
      %v567 = vpack.c.bf16 %v563, %v563
      %v568 = vpack.c.bf16 %v564, %v564
      %v570 = vsel %vm285, %v566, 0
      %v573 = vsel %vm289, %v567, 0
      %v576 = vsel %vm289, %v568, 0
      %578 = vmatprep.subr.bf16.mxu0 %v576
      %579 = vmatpush1.bf16.msra.mxu0 %v573
      %580 = vmatprep.subr.bf16.mxu0 0
      %581 = vmatpush1.bf16.msra.mxu0 0
      %582 = vmatprep.subr.bf16.mxu0 0
      %583 = vmatpush1.bf16.msra.mxu0 0
      %584 = vmatprep.subr.bf16.mxu0 0
      %585 = vmatpush1.bf16.msra.mxu0 0
      %586 = vmatprep.subr.bf16.mxu0 0
      %587 = vmatpush1.bf16.msra.mxu0 0
      %588 = vmatprep.subr.bf16.mxu0 0
      %589 = vmatpush1.bf16.msra.mxu0 0
      %590 = vmatprep.subr.bf16.mxu0 0
      %591 = vmatpush1.bf16.msra.mxu0 0
      %592 = vmatprep.subr.bf16.mxu0 0
      %593 = vmatpush1.bf16.msra.mxu0 0
      %594 = vmatprep.subr.bf16.mxu0 0
      %595 = vmatpush1.bf16.msra.mxu0 0
      %596 = vmatprep.subr.bf16.mxu0 0
      %597 = vmatpush1.bf16.msra.mxu0 0
      %598 = vmatprep.subr.bf16.mxu0 0
      %599 = vmatpush1.bf16.msra.mxu0 0
      %600 = vmatprep.subr.bf16.mxu0 0
      %601 = vmatpush1.bf16.msra.mxu0 0
      %602 = vmatprep.subr.bf16.mxu0 0
      %603 = vmatpush1.bf16.msra.mxu0 0
      %604 = vmatprep.subr.bf16.mxu0 0
      %605 = vmatpush1.bf16.msra.mxu0 0
      %606 = vmatprep.subr.bf16.mxu0 0
      %607 = vmatpush1.bf16.msra.mxu0 0
      %608 = vmatprep.subr.bf16.mxu0 0
      %609 = vmatpush1.bf16.msra.mxu0 0
      %610 = vmatprep.mubr.bf16.mxu0 0
      %611 = vmatmul.mubr.bf16.gmra.mrb[0].mxu0 %v570
      %v612 = vpop.f32.mrb[0].mxu0
      %v613 = vadd.f32 0.0, %v612
      %v614 = vpop.f32.mrb[0].mxu0
      %v615 = vadd.f32 0.0, %v614
      %v616 = vpop.f32.mrb[0].mxu0
      %v617 = vpop.f32.mrb[0].mxu0
      %618 = vdwg.mxu0
      %v619 = vadd.f32 %v541, %v613
      %v620 = vadd.f32 %v542, %v615
      %621 = vrot.lane.b32.xlu0 %v253, 127
      %v622 = vpop.permute.xlu0 %621
      %623 = vrot.lane.b32.xlu0 %v254, 127
      %v624 = vpop.permute.xlu0 %623
      %vm625 = vcmp.lt.s32.totalorder %v264, 127
      %v626 = vsel %vm625, %v622, %v624
      %v627 = vsel %vm625, %v624, %v622
      %s628 = scalar_lea.vmem %s3, 10
      %v629 = vld [vmem:[%s628] sm:$0x3]
      %v631 = vlaneseq
      %v632 = vshrl.u32 %v631, 7
      %v633 = vsub.s32 0, %v632
      %v634 = vrot.slane %v629, %v633
      %v635 = vlaneseq
      %v636 = vshrl.u32 %v635, 7
      %v637 = vsub.s32 1, %v636
      %v638 = vrot.slane %v629, %v637
      %v641 = vmul.f32 %v626, %v634
      %v642 = vmul.f32 %v627, %v638
      %s643 = scalar_lea.vmem %s2, 20
      %v644 = vld [vmem:[%s643] sm:$0xf]
      %v645 = vpack.c.bf16 %v641, %v641
      %v646 = vpack.c.bf16 %v642, %v642
      %v648 = vsel %vm285, %v644, 0
      %v651 = vsel %vm289, %v645, 0
      %v654 = vsel %vm289, %v646, 0
      %656 = vmatprep.subr.bf16.mxu0 %v654
      %657 = vmatpush1.bf16.msra.mxu0 %v651
      %658 = vmatprep.subr.bf16.mxu0 0
      %659 = vmatpush1.bf16.msra.mxu0 0
      %660 = vmatprep.subr.bf16.mxu0 0
      %661 = vmatpush1.bf16.msra.mxu0 0
      %662 = vmatprep.subr.bf16.mxu0 0
      %663 = vmatpush1.bf16.msra.mxu0 0
      %664 = vmatprep.subr.bf16.mxu0 0
      %665 = vmatpush1.bf16.msra.mxu0 0
      %666 = vmatprep.subr.bf16.mxu0 0
      %667 = vmatpush1.bf16.msra.mxu0 0
      %668 = vmatprep.subr.bf16.mxu0 0
      %669 = vmatpush1.bf16.msra.mxu0 0
      %670 = vmatprep.subr.bf16.mxu0 0
      %671 = vmatpush1.bf16.msra.mxu0 0
      %672 = vmatprep.subr.bf16.mxu0 0
      %673 = vmatpush1.bf16.msra.mxu0 0
      %674 = vmatprep.subr.bf16.mxu0 0
      %675 = vmatpush1.bf16.msra.mxu0 0
      %676 = vmatprep.subr.bf16.mxu0 0
      %677 = vmatpush1.bf16.msra.mxu0 0
      %678 = vmatprep.subr.bf16.mxu0 0
      %679 = vmatpush1.bf16.msra.mxu0 0
      %680 = vmatprep.subr.bf16.mxu0 0
      %681 = vmatpush1.bf16.msra.mxu0 0
      %682 = vmatprep.subr.bf16.mxu0 0
      %683 = vmatpush1.bf16.msra.mxu0 0
      %684 = vmatprep.subr.bf16.mxu0 0
      %685 = vmatpush1.bf16.msra.mxu0 0
      %686 = vmatprep.subr.bf16.mxu0 0
      %687 = vmatpush1.bf16.msra.mxu0 0
      %688 = vmatprep.mubr.bf16.mxu0 0
      %689 = vmatmul.mubr.bf16.gmra.mrb[0].mxu0 %v648
      %v690 = vpop.f32.mrb[0].mxu0
      %v691 = vadd.f32 0.0, %v690
      %v692 = vpop.f32.mrb[0].mxu0
      %v693 = vadd.f32 0.0, %v692
      %v694 = vpop.f32.mrb[0].mxu0
      %v695 = vpop.f32.mrb[0].mxu0
      %696 = vdwg.mxu0
      %v697 = vadd.f32 %v619, %v691
      %v698 = vadd.f32 %v620, %v693
      %699 = vrot.lane.b32.xlu0 %v253, 113
      %v700 = vpop.permute.xlu0 %699
      %701 = vrot.lane.b32.xlu0 %v254, 113
      %v702 = vpop.permute.xlu0 %701
      %vm703 = vcmp.lt.s32.totalorder %v264, 113
      %v704 = vsel %vm703, %v700, %v702
      %v705 = vsel %vm703, %v702, %v700
      %s706 = scalar_lea.vmem %s3, 12
      %v707 = vld [vmem:[%s706] sm:$0x3]
      %v709 = vlaneseq
      %v710 = vshrl.u32 %v709, 7
      %v711 = vsub.s32 0, %v710
      %v712 = vrot.slane %v707, %v711
      %v713 = vlaneseq
      %v714 = vshrl.u32 %v713, 7
      %v715 = vsub.s32 1, %v714
      %v716 = vrot.slane %v707, %v715
      %v719 = vmul.f32 %v704, %v712
      %v720 = vmul.f32 %v705, %v716
      %s721 = scalar_lea.vmem %s2, 24
      %v722 = vld [vmem:[%s721] sm:$0xf]
      %v723 = vpack.c.bf16 %v719, %v719
      %v724 = vpack.c.bf16 %v720, %v720
      %v726 = vsel %vm285, %v722, 0
      %v729 = vsel %vm289, %v723, 0
      %v732 = vsel %vm289, %v724, 0
      %734 = vmatprep.subr.bf16.mxu0 %v732
      %735 = vmatpush1.bf16.msra.mxu0 %v729
      %736 = vmatprep.subr.bf16.mxu0 0
      %737 = vmatpush1.bf16.msra.mxu0 0
      %738 = vmatprep.subr.bf16.mxu0 0
      %739 = vmatpush1.bf16.msra.mxu0 0
      %740 = vmatprep.subr.bf16.mxu0 0
      %741 = vmatpush1.bf16.msra.mxu0 0
      %742 = vmatprep.subr.bf16.mxu0 0
      %743 = vmatpush1.bf16.msra.mxu0 0
      %744 = vmatprep.subr.bf16.mxu0 0
      %745 = vmatpush1.bf16.msra.mxu0 0
      %746 = vmatprep.subr.bf16.mxu0 0
      %747 = vmatpush1.bf16.msra.mxu0 0
      %748 = vmatprep.subr.bf16.mxu0 0
      %749 = vmatpush1.bf16.msra.mxu0 0
      %750 = vmatprep.subr.bf16.mxu0 0
      %751 = vmatpush1.bf16.msra.mxu0 0
      %752 = vmatprep.subr.bf16.mxu0 0
      %753 = vmatpush1.bf16.msra.mxu0 0
      %754 = vmatprep.subr.bf16.mxu0 0
      %755 = vmatpush1.bf16.msra.mxu0 0
      %756 = vmatprep.subr.bf16.mxu0 0
      %757 = vmatpush1.bf16.msra.mxu0 0
      %758 = vmatprep.subr.bf16.mxu0 0
      %759 = vmatpush1.bf16.msra.mxu0 0
      %760 = vmatprep.subr.bf16.mxu0 0
      %761 = vmatpush1.bf16.msra.mxu0 0
      %762 = vmatprep.subr.bf16.mxu0 0
      %763 = vmatpush1.bf16.msra.mxu0 0
      %764 = vmatprep.subr.bf16.mxu0 0
      %765 = vmatpush1.bf16.msra.mxu0 0
      %766 = vmatprep.mubr.bf16.mxu0 0
      %767 = vmatmul.mubr.bf16.gmra.mrb[0].mxu0 %v726
      %v768 = vpop.f32.mrb[0].mxu0
      %v769 = vadd.f32 0.0, %v768
      %v770 = vpop.f32.mrb[0].mxu0
      %v771 = vadd.f32 0.0, %v770
      %v772 = vpop.f32.mrb[0].mxu0
      %v773 = vpop.f32.mrb[0].mxu0
      %774 = vdwg.mxu0
      %v775 = vadd.f32 %v697, %v769
      %v776 = vadd.f32 %v698, %v771
      %777 = vrot.lane.b32.xlu0 %v253, 112
      %v778 = vpop.permute.xlu0 %777
      %779 = vrot.lane.b32.xlu0 %v254, 112
      %v780 = vpop.permute.xlu0 %779
      %vm781 = vcmp.lt.s32.totalorder %v264, 112
      %v782 = vsel %vm781, %v778, %v780
      %v783 = vsel %vm781, %v780, %v778
      %s784 = scalar_lea.vmem %s3, 14
      %v785 = vld [vmem:[%s784] sm:$0x3]
      %v787 = vlaneseq
      %v788 = vshrl.u32 %v787, 7
      %v789 = vsub.s32 0, %v788
      %v790 = vrot.slane %v785, %v789
      %v791 = vlaneseq
      %v792 = vshrl.u32 %v791, 7
      %v793 = vsub.s32 1, %v792
      %v794 = vrot.slane %v785, %v793
      %v797 = vmul.f32 %v782, %v790
      %v798 = vmul.f32 %v783, %v794
      %s799 = scalar_lea.vmem %s2, 28
      %v800 = vld [vmem:[%s799] sm:$0xf]
      %v801 = vpack.c.bf16 %v797, %v797
      %v802 = vpack.c.bf16 %v798, %v798
      %v804 = vsel %vm285, %v800, 0
      %v807 = vsel %vm289, %v801, 0
      %v810 = vsel %vm289, %v802, 0
      %812 = vmatprep.subr.bf16.mxu0 %v810
      %813 = vmatpush1.bf16.msra.mxu0 %v807
      %814 = vmatprep.subr.bf16.mxu0 0
      %815 = vmatpush1.bf16.msra.mxu0 0
      %816 = vmatprep.subr.bf16.mxu0 0
      %817 = vmatpush1.bf16.msra.mxu0 0
      %818 = vmatprep.subr.bf16.mxu0 0
      %819 = vmatpush1.bf16.msra.mxu0 0
      %820 = vmatprep.subr.bf16.mxu0 0
      %821 = vmatpush1.bf16.msra.mxu0 0
      %822 = vmatprep.subr.bf16.mxu0 0
      %823 = vmatpush1.bf16.msra.mxu0 0
      %824 = vmatprep.subr.bf16.mxu0 0
      %825 = vmatpush1.bf16.msra.mxu0 0
      %826 = vmatprep.subr.bf16.mxu0 0
      %827 = vmatpush1.bf16.msra.mxu0 0
      %828 = vmatprep.subr.bf16.mxu0 0
      %829 = vmatpush1.bf16.msra.mxu0 0
      %830 = vmatprep.subr.bf16.mxu0 0
      %831 = vmatpush1.bf16.msra.mxu0 0
      %832 = vmatprep.subr.bf16.mxu0 0
      %833 = vmatpush1.bf16.msra.mxu0 0
      %834 = vmatprep.subr.bf16.mxu0 0
      %835 = vmatpush1.bf16.msra.mxu0 0
      %836 = vmatprep.subr.bf16.mxu0 0
      %837 = vmatpush1.bf16.msra.mxu0 0
      %838 = vmatprep.subr.bf16.mxu0 0
      %839 = vmatpush1.bf16.msra.mxu0 0
      %840 = vmatprep.subr.bf16.mxu0 0
      %841 = vmatpush1.bf16.msra.mxu0 0
      %842 = vmatprep.subr.bf16.mxu0 0
      %843 = vmatpush1.bf16.msra.mxu0 0
      %844 = vmatprep.mubr.bf16.mxu0 0
      %845 = vmatmul.mubr.bf16.gmra.mrb[0].mxu0 %v804
      %v846 = vpop.f32.mrb[0].mxu0
      %v847 = vadd.f32 0.0, %v846
      %v848 = vpop.f32.mrb[0].mxu0
      %v849 = vadd.f32 0.0, %v848
      %v850 = vpop.f32.mrb[0].mxu0
      %v851 = vpop.f32.mrb[0].mxu0
      %852 = vdwg.mxu0
      %v853 = vadd.f32 %v775, %v847
      %v854 = vadd.f32 %v776, %v849
      %855 = vrot.lane.b32.xlu0 %v253, 111
      %v856 = vpop.permute.xlu0 %855
      %857 = vrot.lane.b32.xlu0 %v254, 111
      %v858 = vpop.permute.xlu0 %857
      %vm859 = vcmp.lt.s32.totalorder %v264, 111
      %v860 = vsel %vm859, %v856, %v858
      %v861 = vsel %vm859, %v858, %v856
      %s862 = scalar_lea.vmem %s3, 16
      %v863 = vld [vmem:[%s862] sm:$0x3]
      %v865 = vlaneseq
      %v866 = vshrl.u32 %v865, 7
      %v867 = vsub.s32 0, %v866
      %v868 = vrot.slane %v863, %v867
      %v869 = vlaneseq
      %v870 = vshrl.u32 %v869, 7
      %v871 = vsub.s32 1, %v870
      %v872 = vrot.slane %v863, %v871
      %v875 = vmul.f32 %v860, %v868
      %v876 = vmul.f32 %v861, %v872
      %s877 = scalar_lea.vmem %s2, 32
      %v878 = vld [vmem:[%s877] sm:$0xf]
      %v879 = vpack.c.bf16 %v875, %v875
      %v880 = vpack.c.bf16 %v876, %v876
      %v882 = vsel %vm285, %v878, 0
      %v885 = vsel %vm289, %v879, 0
      %v888 = vsel %vm289, %v880, 0
      %890 = vmatprep.subr.bf16.mxu0 %v888
      %891 = vmatpush1.bf16.msra.mxu0 %v885
      %892 = vmatprep.subr.bf16.mxu0 0
      %893 = vmatpush1.bf16.msra.mxu0 0
      %894 = vmatprep.subr.bf16.mxu0 0
      %895 = vmatpush1.bf16.msra.mxu0 0
      %896 = vmatprep.subr.bf16.mxu0 0
      %897 = vmatpush1.bf16.msra.mxu0 0
      %898 = vmatprep.subr.bf16.mxu0 0
      %899 = vmatpush1.bf16.msra.mxu0 0
      %900 = vmatprep.subr.bf16.mxu0 0
      %901 = vmatpush1.bf16.msra.mxu0 0
      %902 = vmatprep.subr.bf16.mxu0 0
      %903 = vmatpush1.bf16.msra.mxu0 0
      %904 = vmatprep.subr.bf16.mxu0 0
      %905 = vmatpush1.bf16.msra.mxu0 0
      %906 = vmatprep.subr.bf16.mxu0 0
      %907 = vmatpush1.bf16.msra.mxu0 0
      %908 = vmatprep.subr.bf16.mxu0 0
      %909 = vmatpush1.bf16.msra.mxu0 0
      %910 = vmatprep.subr.bf16.mxu0 0
      %911 = vmatpush1.bf16.msra.mxu0 0
      %912 = vmatprep.subr.bf16.mxu0 0
      %913 = vmatpush1.bf16.msra.mxu0 0
      %914 = vmatprep.subr.bf16.mxu0 0
      %915 = vmatpush1.bf16.msra.mxu0 0
      %916 = vmatprep.subr.bf16.mxu0 0
      %917 = vmatpush1.bf16.msra.mxu0 0
      %918 = vmatprep.subr.bf16.mxu0 0
      %919 = vmatpush1.bf16.msra.mxu0 0
      %920 = vmatprep.subr.bf16.mxu0 0
      %921 = vmatpush1.bf16.msra.mxu0 0
      %922 = vmatprep.mubr.bf16.mxu0 0
      %923 = vmatmul.mubr.bf16.gmra.mrb[0].mxu0 %v882
      %v924 = vpop.f32.mrb[0].mxu0
      %v925 = vadd.f32 0.0, %v924
      %v926 = vpop.f32.mrb[0].mxu0
      %v927 = vadd.f32 0.0, %v926
      %v928 = vpop.f32.mrb[0].mxu0
      %v929 = vpop.f32.mrb[0].mxu0
      %930 = vdwg.mxu0
      %v931 = vadd.f32 %v853, %v925
      %v932 = vadd.f32 %v854, %v927
      %933 = vst [vmem:[%s231] sm:$0xff] %v931
      %934 = vst [vmem:[%s231 + $0x8] sm:$0xff] %v932
      %v935 = vadd.f32 %v931, %v932
      %936 = vadd.xlane.f32.xlu0 %v935
      %v937 = vpop.xlane.xlu0 %936
      %vm938 = vcmask 7168
      %939 = vst.msk [vmem:[%s235] sm:$0xff] %vm938, %v937
      %v940 = vmul.f32 %v931, %v931
      %v941 = vmul.f32 %v932, %v932
      %v942 = vadd.f32 %v940, %v941
      %943 = vadd.xlane.f32.xlu0 %v942
      %v944 = vpop.xlane.xlu0 %943
      %vm945 = vcmask 15368
      %946 = vst.msk [vmem:[%s235] sm:$0xff] %vm945, %v944
      %p947 = scmp.lt.s32.totalorder %s17, 1
      %s948 = scalar_select %p947, %s17, 1
      %s949 = smul.addr %s948, 2
      %s950 = smul.addr %s949, 8
      %s951 = scalar_lea.vmem %s4, %s950
      %p952 = scmp.lt.s32.totalorder %s17, 1
      %s953 = scalar_select %p952, %s17, 1
      %s954 = smul.addr %s953, 8
      %s955 = scalar_lea.vmem %s5, %s954
      // Predicated region
      $region37: #{residual_block_pallas.4} parent=35 // pred_check
        %p956 = pneg %p124
      $region38: #{residual_block_pallas.4} parent=35 // pred_check_branch
        %958 = sbr.rel (%p956) target = $region40
      $region39: #{residual_block_pallas.4} parent=35 // pred_region
        _
      $region40: #{residual_block_pallas.4} parent=35 // pred_fallthru
        _
      // Predicated region
      $region41: #{residual_block_pallas.4} parent=35 // pred_check
        %p959 = pneg %p150
      $region42: #{residual_block_pallas.4} parent=35 // pred_check_branch
        %961 = sbr.rel (%p959) target = $region44
      $region43: #{residual_block_pallas.4} parent=35 // pred_region
        _
      $region44: #{residual_block_pallas.4} parent=35 // pred_fallthru
        _
    $region36: #{residual_block_pallas.4} parent=5 // pred_fallthru
      _
    %p962 = scmp.le.s32.totalorder 2, %s12
    // Predicated region
    $region45: #{residual_block_pallas.4} parent=5 // pred_check
      %p963 = pneg %p962
    $region46: #{residual_block_pallas.4} parent=5 // pred_check_branch
      %965 = sbr.rel (%p963) target = $region48
    $region47: #{residual_block_pallas.4} parent=5 // pred_region
      %s966 = ssub.s32 %s12, 2
      // Predicated region
      $region49: #{residual_block_pallas.4} parent=47 // pred_check
        %p967 = pneg %p130
      $region50: #{residual_block_pallas.4} parent=47 // pred_check_branch
        %969 = sbr.rel (%p967) target = $region52
      $region51: #{residual_block_pallas.4} parent=47 // pred_region
        %p970 = scmp.lt.s32.totalorder %s18, 1
        %s971 = scalar_select %p970, %s18, 1
        %s972 = smul.addr %s971, 2
        %s973 = smul.addr %s972, 8
        %s974 = scalar_lea.vmem %s4, %s973
      $region52: #{residual_block_pallas.4} parent=47 // pred_fallthru
        _
      // Predicated region
      $region53: #{residual_block_pallas.4} parent=47 // pred_check
        %p975 = pneg %p156
      $region54: #{residual_block_pallas.4} parent=47 // pred_check_branch
        %977 = sbr.rel (%p975) target = $region56
      $region55: #{residual_block_pallas.4} parent=47 // pred_region
        %p978 = scmp.lt.s32.totalorder %s18, 1
        %s979 = scalar_select %p978, %s18, 1
        %s980 = smul.addr %s979, 8
        %s981 = scalar_lea.vmem %s5, %s980
      $region56: #{residual_block_pallas.4} parent=47 // pred_fallthru
        _
    $region48: #{residual_block_pallas.4} parent=5 // pred_fallthru
      _
  $region6: #{residual_block_pallas.4} parent=0 // loop_footer
    %s16 = sadd.s32 1, %s12
  $region7: #{residual_block_pallas.4} parent=0 // loop_footer_branch
    %11 = sbr.rel target = $region3
  $region8: #{residual_block_pallas.4} parent=0 // loop_exit
    _

// kernel: residual_block_pallas.3
$region0: #{residual_block_pallas.3}
  #allocation0 [shape = 'u32[]', space=smem, size = 0x4, offset = 0x4, fixed_abs, tag = 'smem constant byte address 0x4 - core index']
  #allocation1 [shape = 'u32[144,128]{1,0:T(1,128)}', space=vmem, size = 0x12000, scoped, tag = 'internal scratch']
  %s0 = inlined_call_operand.vmem [shape: f32[2,8,256], index: 0, kind: input, shape index: {}]
  %s1 = inlined_call_operand.vmem [shape: bf16[9,8,8], index: 1, kind: input, shape index: {}]
  %s2 = inlined_call_operand.vmem [shape: f32[9,1,256], index: 2, kind: input, shape index: {}]
  %s3 = inlined_call_operand.vmem [shape: f32[2,8,256], index: 3, kind: output, shape index: {0}]
  %s4 = inlined_call_operand.vmem [shape: f32[2,8,2], index: 4, kind: output, shape index: {1}]
  %5 = xla_tuple %s3, %s4
  %s6 = sld [smem:[#allocation0]]
  $region53: #{residual_block_pallas.3} parent=0
    _
  %s8 = ssub.s32 1, %s6
  %s9 = scalar_select 0, %s8, %s6
  loop: start=0, step=1, limit=4
  $region2: #{residual_block_pallas.3} parent=0 // loop_pre_header
    _
  $region3: #{residual_block_pallas.3} parent=0 // loop_header
    %s11 = sphi 0, %s15
    %p12 = scmp.ge.s32.totalorder %s11, 4
    %s21 = sphi 0, %s23
    %s24 = sphi 0, %s21
    %s25 = sphi 0, %s24
    %s41 = sphi 0, %s25
    %s45 = sphi 0, %s45
    %s47 = sphi 0, %s45
    %s48 = sphi 0, %s47
    %s62 = sphi 0, %s48
    %s66 = sphi 0, %s66
    %s68 = sphi 0, %s66
    %s69 = sphi 0, %s68
    %s83 = sphi 0, %s69
    %s89 = sphi 0, %s91
    %s92 = sphi 0, %s89
    %s93 = sphi 0, %s92
    %s109 = sphi 0, %s93
    %s115 = sphi 0, %s117
    %s118 = sphi 0, %s115
    %s119 = sphi 0, %s118
    %s135 = sphi 0, %s119
  $region4: #{residual_block_pallas.3} parent=0 // loop_header_branch
    %14 = sbr.rel (%p12) target = $region8
  $region5: #{residual_block_pallas.3} parent=0 // loop_body
    %s16 = ssub.s32 %s11, 1
    %s17 = ssub.s32 %s11, 2
    %s18 = sadd.s32 %s11, 1
    %s19 = ssub.s32 %s11, %s18
    %p20 = scmp.eq.s32.totalorder %s19, 0
    %s22 = sadd.s32 %s21, 1
    %s23 = scalar_select %p20, %s21, %s22
    %p26 = pneg %p20
    %p27 = scmp.eq.s32.totalorder %s11, 1
    %p28 = por %p26, %p27
    %p29 = scmp.ne.s32.totalorder %s21, %s24
    %p30 = scmp.eq.s32.totalorder %s11, 0
    %p31 = por %p29, %p30
    %p32 = scmp.ne.s32.totalorder %s21, %s24
    %p33 = scmp.eq.s32.totalorder %s16, 1
    %p34 = por %p32, %p33
    %p35 = scmp.ne.s32.totalorder %s24, %s25
    %p36 = scmp.eq.s32.totalorder %s16, 0
    %p37 = por %p35, %p36
    %p38 = scmp.ne.s32.totalorder %s24, %s25
    %p39 = scmp.eq.s32.totalorder %s17, 1
    %p40 = por %p38, %p39
    %p42 = scmp.ne.s32.totalorder %s25, %s41
    %p43 = scmp.eq.s32.totalorder %s17, 0
    %p44 = por %p42, %p43
    %s46 = sadd.s32 %s45, 1
    %p49 = scmp.eq.s32.totalorder %s11, 1
    %p50 = scmp.ne.s32.totalorder %s45, %s47
    %p51 = scmp.eq.s32.totalorder %s11, 0
    %p52 = por %p50, %p51
    %p53 = scmp.ne.s32.totalorder %s45, %s47
    %p54 = scmp.eq.s32.totalorder %s16, 1
    %p55 = por %p53, %p54
    %p56 = scmp.ne.s32.totalorder %s47, %s48
    %p57 = scmp.eq.s32.totalorder %s16, 0
    %p58 = por %p56, %p57
    %p59 = scmp.ne.s32.totalorder %s47, %s48
    %p60 = scmp.eq.s32.totalorder %s17, 1
    %p61 = por %p59, %p60
    %p63 = scmp.ne.s32.totalorder %s48, %s62
    %p64 = scmp.eq.s32.totalorder %s17, 0
    %p65 = por %p63, %p64
    %s67 = sadd.s32 %s66, 1
    %p70 = scmp.eq.s32.totalorder %s11, 1
    %p71 = scmp.ne.s32.totalorder %s66, %s68
    %p72 = scmp.eq.s32.totalorder %s11, 0
    %p73 = por %p71, %p72
    %p74 = scmp.ne.s32.totalorder %s66, %s68
    %p75 = scmp.eq.s32.totalorder %s16, 1
    %p76 = por %p74, %p75
    %p77 = scmp.ne.s32.totalorder %s68, %s69
    %p78 = scmp.eq.s32.totalorder %s16, 0
    %p79 = por %p77, %p78
    %p80 = scmp.ne.s32.totalorder %s68, %s69
    %p81 = scmp.eq.s32.totalorder %s17, 1
    %p82 = por %p80, %p81
    %p84 = scmp.ne.s32.totalorder %s69, %s83
    %p85 = scmp.eq.s32.totalorder %s17, 0
    %p86 = por %p84, %p85
    %s87 = ssub.s32 %s11, %s18
    %p88 = scmp.eq.s32.totalorder %s87, 0
    %s90 = sadd.s32 %s89, 1
    %s91 = scalar_select %p88, %s89, %s90
    %p94 = pneg %p88
    %p95 = scmp.eq.s32.totalorder %s11, 1
    %p96 = por %p94, %p95
    %p97 = scmp.ne.s32.totalorder %s89, %s92
    %p98 = scmp.eq.s32.totalorder %s11, 0
    %p99 = por %p97, %p98
    %p100 = scmp.ne.s32.totalorder %s89, %s92
    %p101 = scmp.eq.s32.totalorder %s16, 1
    %p102 = por %p100, %p101
    %p103 = scmp.ne.s32.totalorder %s92, %s93
    %p104 = scmp.eq.s32.totalorder %s16, 0
    %p105 = por %p103, %p104
    %p106 = scmp.ne.s32.totalorder %s92, %s93
    %p107 = scmp.eq.s32.totalorder %s17, 1
    %p108 = por %p106, %p107
    %p110 = scmp.ne.s32.totalorder %s93, %s109
    %p111 = scmp.eq.s32.totalorder %s17, 0
    %p112 = por %p110, %p111
    %s113 = ssub.s32 %s11, %s18
    %p114 = scmp.eq.s32.totalorder %s113, 0
    %s116 = sadd.s32 %s115, 1
    %s117 = scalar_select %p114, %s115, %s116
    %p120 = pneg %p114
    %p121 = scmp.eq.s32.totalorder %s11, 1
    %p122 = por %p120, %p121
    %p123 = scmp.ne.s32.totalorder %s115, %s118
    %p124 = scmp.eq.s32.totalorder %s11, 0
    %p125 = por %p123, %p124
    %p126 = scmp.ne.s32.totalorder %s115, %s118
    %p127 = scmp.eq.s32.totalorder %s16, 1
    %p128 = por %p126, %p127
    %p129 = scmp.ne.s32.totalorder %s118, %s119
    %p130 = scmp.eq.s32.totalorder %s16, 0
    %p131 = por %p129, %p130
    %p132 = scmp.ne.s32.totalorder %s118, %s119
    %p133 = scmp.eq.s32.totalorder %s17, 1
    %p134 = por %p132, %p133
    %p136 = scmp.ne.s32.totalorder %s119, %s135
    %p137 = scmp.eq.s32.totalorder %s17, 0
    %p138 = por %p136, %p137
    %p139 = scmp.le.s32.totalorder 1, %s11
    %p140 = scmp.lt.s32.totalorder %s11, 3
    %p141 = pnand %p139, %p140
    %p142 = pneg %p141
    // Predicated region
    $region9: #{residual_block_pallas.3} parent=5 // pred_check
      _
    $region10: #{residual_block_pallas.3} parent=5 // pred_check_branch
      %144 = sbr.rel (%p141) target = $region12
    $region11: #{residual_block_pallas.3} parent=5 // pred_region
      %s145 = ssub.s32 %s11, 1
      // Predicated region
      $region13: #{residual_block_pallas.3} parent=11 // pred_check
        %p146 = pneg %p58
      $region14: #{residual_block_pallas.3} parent=11 // pred_check_branch
        %148 = sbr.rel (%p146) target = $region16
      $region15: #{residual_block_pallas.3} parent=11 // pred_region
        _
      $region16: #{residual_block_pallas.3} parent=11 // pred_fallthru
        _
      // Predicated region
      $region17: #{residual_block_pallas.3} parent=11 // pred_check
        %p149 = pneg %p79
      $region18: #{residual_block_pallas.3} parent=11 // pred_check_branch
        %151 = sbr.rel (%p149) target = $region20
      $region19: #{residual_block_pallas.3} parent=11 // pred_region
        _
      $region20: #{residual_block_pallas.3} parent=11 // pred_fallthru
        _
    $region12: #{residual_block_pallas.3} parent=5 // pred_fallthru
      _
    %p152 = scmp.lt.s32.totalorder %s11, 2
    // Predicated region
    $region21: #{residual_block_pallas.3} parent=5 // pred_check
      %p153 = pneg %p152
    $region22: #{residual_block_pallas.3} parent=5 // pred_check_branch
      %155 = sbr.rel (%p153) target = $region24
    $region23: #{residual_block_pallas.3} parent=5 // pred_region
      // Predicated region
      $region25: #{residual_block_pallas.3} parent=23 // pred_check
        %p156 = pneg %p31
      $region26: #{residual_block_pallas.3} parent=23 // pred_check_branch
        %158 = sbr.rel (%p156) target = $region28
      $region27: #{residual_block_pallas.3} parent=23 // pred_region
        %p159 = scmp.lt.s32.totalorder %s11, 1
        %s160 = scalar_select %p159, %s11, 1
        %s161 = smul.addr %s160, 2
        %s162 = smul.addr %s161, 8
        %s163 = scalar_lea.vmem %s0, %s162
      $region28: #{residual_block_pallas.3} parent=23 // pred_fallthru
        _
    $region24: #{residual_block_pallas.3} parent=5 // pred_fallthru
      _
    %p164 = scmp.le.s32.totalorder 1, %s11
    %p165 = scmp.lt.s32.totalorder %s11, 3
    %p166 = pnand %p164, %p165
    %p167 = pneg %p166
    // Predicated region
    $region29: #{residual_block_pallas.3} parent=5 // pred_check
      _
    $region30: #{residual_block_pallas.3} parent=5 // pred_check_branch
      %169 = sbr.rel (%p166) target = $region32
    $region31: #{residual_block_pallas.3} parent=5 // pred_region
      %s170 = ssub.s32 %s11, 1
      %p171 = scmp.lt.s32.totalorder %s16, 1
      %s172 = scalar_select %p171, %s16, 1
      %s173 = smul.addr %s172, 2
      %s174 = smul.addr %s173, 8
      %s175 = scalar_lea.vmem %s0, %s174
      %p176 = pneg %p37
      %p177 = pneg %p34
      %p178 = pneg %p58
      %p179 = pneg %p55
      %p180 = pneg %p79
      %p181 = pneg %p76
      %p182 = pneg %p105
      %p183 = pneg %p102
      %p184 = scmp.lt.s32.totalorder %s16, 1
      %s185 = scalar_select %p184, %s16, 1
      %s186 = smul.addr %s185, 2
      %s187 = smul.addr %s186, 8
      %s188 = scalar_lea.vmem %s3, %s187
      %p189 = pneg %p131
      %p190 = pneg %p128
      %p191 = scmp.lt.s32.totalorder %s16, 1
      %s192 = scalar_select %p191, %s16, 1
      %s193 = smul.addr %s192, 8
      %s194 = scalar_lea.vmem %s4, %s193
      %p195 = scmp.lt.s32.totalorder %s16, 1
      %s196 = scalar_select %p195, %s16, 1
      %s197 = smul.addr %s196, 2
      %s198 = smul.addr %s197, 8
      %s199 = scalar_lea.vmem %s0, %s198
      %p200 = scmp.lt.s32.totalorder %s16, 1
      %s201 = scalar_select %p200, %s16, 1
      %s202 = smul.addr %s201, 2
      %s203 = smul.addr %s202, 8
      %s204 = scalar_lea.vmem %s3, %s203
      %p205 = scmp.lt.s32.totalorder %s16, 1
      %s206 = scalar_select %p205, %s16, 1
      %s207 = smul.addr %s206, 8
      %s208 = scalar_lea.vmem %s4, %s207
      %v210 = vld [vmem:[%s199] sm:$0xff]
      %v211 = vld [vmem:[%s199 + $0x8] sm:$0xff]
      %s212 = scalar_lea.vmem %s1, 16
      %v213 = vld [vmem:[%s212] sm:$0xf]
      %v214 = vpack.c.bf16 %v210, %v210
      %v215 = vpack.c.bf16 %v211, %v211
      %216 = vrot.lane.b32.xlu0 %v210, 17
      %v217 = vpop.permute.xlu0 %216
      %218 = vrot.lane.b32.xlu0 %v211, 17
      %v219 = vpop.permute.xlu0 %218
      %v220 = vlaneseq
      %v221 = vand.u32 %v220, 127
      %vm222 = vcmp.lt.s32.totalorder %v221, 17
      %v223 = vsel %vm222, %v217, %v219
      %v224 = vsel %vm222, %v219, %v217
      %v225 = vld [vmem:[%s2] sm:$0x3]
      %v227 = vlaneseq
      %v228 = vshrl.u32 %v227, 7
      %v229 = vsub.s32 0, %v228
      %v230 = vrot.slane %v225, %v229
      %v231 = vlaneseq
      %v232 = vshrl.u32 %v231, 7
      %v233 = vsub.s32 1, %v232
      %v234 = vrot.slane %v225, %v233
      %v237 = vmul.f32 %v224, %v230
      %v238 = vmul.f32 %v223, %v234
      %v239 = vld [vmem:[%s1] sm:$0xf]
      %v240 = vpack.c.bf16 %v237, %v237
      %v241 = vpack.c.bf16 %v238, %v238
      %vm242 = vcmask 64512
      %v244 = vsel %vm242, %v239, 0
      %vm246 = vcmask 1043456
      %v248 = vsel %vm246, %v240, 0
      %v251 = vsel %vm246, %v241, 0
      %253 = vmatprep.subr.bf16.mxu0 %v251
      %254 = vmatpush1.bf16.msra.mxu0 %v248
      %255 = vmatprep.subr.bf16.mxu0 0
      %256 = vmatpush1.bf16.msra.mxu0 0
      %257 = vmatprep.subr.bf16.mxu0 0
      %258 = vmatpush1.bf16.msra.mxu0 0
      %259 = vmatprep.subr.bf16.mxu0 0
      %260 = vmatpush1.bf16.msra.mxu0 0
      %261 = vmatprep.subr.bf16.mxu0 0
      %262 = vmatpush1.bf16.msra.mxu0 0
      %263 = vmatprep.subr.bf16.mxu0 0
      %264 = vmatpush1.bf16.msra.mxu0 0
      %265 = vmatprep.subr.bf16.mxu0 0
      %266 = vmatpush1.bf16.msra.mxu0 0
      %267 = vmatprep.subr.bf16.mxu0 0
      %268 = vmatpush1.bf16.msra.mxu0 0
      %269 = vmatprep.subr.bf16.mxu0 0
      %270 = vmatpush1.bf16.msra.mxu0 0
      %271 = vmatprep.subr.bf16.mxu0 0
      %272 = vmatpush1.bf16.msra.mxu0 0
      %273 = vmatprep.subr.bf16.mxu0 0
      %274 = vmatpush1.bf16.msra.mxu0 0
      %275 = vmatprep.subr.bf16.mxu0 0
      %276 = vmatpush1.bf16.msra.mxu0 0
      %277 = vmatprep.subr.bf16.mxu0 0
      %278 = vmatpush1.bf16.msra.mxu0 0
      %279 = vmatprep.subr.bf16.mxu0 0
      %280 = vmatpush1.bf16.msra.mxu0 0
      %281 = vmatprep.subr.bf16.mxu0 0
      %282 = vmatpush1.bf16.msra.mxu0 0
      %283 = vmatprep.subr.bf16.mxu0 0
      %284 = vmatpush1.bf16.msra.mxu0 0
      %285 = vmatprep.mubr.bf16.mxu0 0
      %286 = vmatmul.mubr.bf16.gmra.mrb[0].mxu0 %v244
      %v287 = vpop.f32.mrb[0].mxu0
      %v288 = vadd.f32 0.0, %v287
      %v289 = vpop.f32.mrb[0].mxu0
      %v290 = vadd.f32 0.0, %v289
      %v291 = vpop.f32.mrb[0].mxu0
      %v292 = vpop.f32.mrb[0].mxu0
      %293 = vdwg.mxu0
      %v295 = vsel %vm242, %v213, 0
      %v298 = vsel %vm246, %v214, 0
      %v301 = vsel %vm246, %v215, 0
      %303 = vmatprep.subr.bf16.mxu0 %v301
      %304 = vmatpush1.bf16.msra.mxu0 %v298
      %305 = vmatprep.subr.bf16.mxu0 0
      %306 = vmatpush1.bf16.msra.mxu0 0
      %307 = vmatprep.subr.bf16.mxu0 0
      %308 = vmatpush1.bf16.msra.mxu0 0
      %309 = vmatprep.subr.bf16.mxu0 0
      %310 = vmatpush1.bf16.msra.mxu0 0
      %311 = vmatprep.subr.bf16.mxu0 0
      %312 = vmatpush1.bf16.msra.mxu0 0
      %313 = vmatprep.subr.bf16.mxu0 0
      %314 = vmatpush1.bf16.msra.mxu0 0
      %315 = vmatprep.subr.bf16.mxu0 0
      %316 = vmatpush1.bf16.msra.mxu0 0
      %317 = vmatprep.subr.bf16.mxu0 0
      %318 = vmatpush1.bf16.msra.mxu0 0
      %319 = vmatprep.subr.bf16.mxu0 0
      %320 = vmatpush1.bf16.msra.mxu0 0
      %321 = vmatprep.subr.bf16.mxu0 0
      %322 = vmatpush1.bf16.msra.mxu0 0
      %323 = vmatprep.subr.bf16.mxu0 0
      %324 = vmatpush1.bf16.msra.mxu0 0
      %325 = vmatprep.subr.bf16.mxu0 0
      %326 = vmatpush1.bf16.msra.mxu0 0
      %327 = vmatprep.subr.bf16.mxu0 0
      %328 = vmatpush1.bf16.msra.mxu0 0
      %329 = vmatprep.subr.bf16.mxu0 0
      %330 = vmatpush1.bf16.msra.mxu0 0
      %331 = vmatprep.subr.bf16.mxu0 0
      %332 = vmatpush1.bf16.msra.mxu0 0
      %333 = vmatprep.subr.bf16.mxu0 0
      %334 = vmatpush1.bf16.msra.mxu0 0
      %335 = vmatprep.mubr.bf16.mxu0 0
      %336 = vmatmul.mubr.bf16.gmra.mrb[0].mxu0 %v295
      %v337 = vpop.f32.mrb[0].mxu0
      %v338 = vadd.f32 %v288, %v337
      %v339 = vpop.f32.mrb[0].mxu0
      %v340 = vadd.f32 %v290, %v339
      %v341 = vpop.f32.mrb[0].mxu0
      %v342 = vpop.f32.mrb[0].mxu0
      %343 = vdwg.mxu0
      %344 = vrot.lane.b32.xlu0 %v210, 16
      %v345 = vpop.permute.xlu0 %344
      %346 = vrot.lane.b32.xlu0 %v211, 16
      %v347 = vpop.permute.xlu0 %346
      %vm348 = vcmp.lt.s32.totalorder %v221, 16
      %v349 = vsel %vm348, %v345, %v347
      %v350 = vsel %vm348, %v347, %v345
      %s351 = scalar_lea.vmem %s2, 2
      %v352 = vld [vmem:[%s351] sm:$0x3]
      %v354 = vlaneseq
      %v355 = vshrl.u32 %v354, 7
      %v356 = vsub.s32 0, %v355
      %v357 = vrot.slane %v352, %v356
      %v358 = vlaneseq
      %v359 = vshrl.u32 %v358, 7
      %v360 = vsub.s32 1, %v359
      %v361 = vrot.slane %v352, %v360
      %v364 = vmul.f32 %v350, %v357
      %v365 = vmul.f32 %v349, %v361
      %s366 = scalar_lea.vmem %s1, 4
      %v367 = vld [vmem:[%s366] sm:$0xf]
      %v368 = vpack.c.bf16 %v364, %v364
      %v369 = vpack.c.bf16 %v365, %v365
      %v371 = vsel %vm242, %v367, 0
      %v374 = vsel %vm246, %v368, 0
      %v377 = vsel %vm246, %v369, 0
      %379 = vmatprep.subr.bf16.mxu0 %v377
      %380 = vmatpush1.bf16.msra.mxu0 %v374
      %381 = vmatprep.subr.bf16.mxu0 0
      %382 = vmatpush1.bf16.msra.mxu0 0
      %383 = vmatprep.subr.bf16.mxu0 0
      %384 = vmatpush1.bf16.msra.mxu0 0
      %385 = vmatprep.subr.bf16.mxu0 0
      %386 = vmatpush1.bf16.msra.mxu0 0
      %387 = vmatprep.subr.bf16.mxu0 0
      %388 = vmatpush1.bf16.msra.mxu0 0
      %389 = vmatprep.subr.bf16.mxu0 0
      %390 = vmatpush1.bf16.msra.mxu0 0
      %391 = vmatprep.subr.bf16.mxu0 0
      %392 = vmatpush1.bf16.msra.mxu0 0
      %393 = vmatprep.subr.bf16.mxu0 0
      %394 = vmatpush1.bf16.msra.mxu0 0
      %395 = vmatprep.subr.bf16.mxu0 0
      %396 = vmatpush1.bf16.msra.mxu0 0
      %397 = vmatprep.subr.bf16.mxu0 0
      %398 = vmatpush1.bf16.msra.mxu0 0
      %399 = vmatprep.subr.bf16.mxu0 0
      %400 = vmatpush1.bf16.msra.mxu0 0
      %401 = vmatprep.subr.bf16.mxu0 0
      %402 = vmatpush1.bf16.msra.mxu0 0
      %403 = vmatprep.subr.bf16.mxu0 0
      %404 = vmatpush1.bf16.msra.mxu0 0
      %405 = vmatprep.subr.bf16.mxu0 0
      %406 = vmatpush1.bf16.msra.mxu0 0
      %407 = vmatprep.subr.bf16.mxu0 0
      %408 = vmatpush1.bf16.msra.mxu0 0
      %409 = vmatprep.subr.bf16.mxu0 0
      %410 = vmatpush1.bf16.msra.mxu0 0
      %411 = vmatprep.mubr.bf16.mxu0 0
      %412 = vmatmul.mubr.bf16.gmra.mrb[0].mxu0 %v371
      %v413 = vpop.f32.mrb[0].mxu0
      %v414 = vadd.f32 0.0, %v413
      %v415 = vpop.f32.mrb[0].mxu0
      %v416 = vadd.f32 0.0, %v415
      %v417 = vpop.f32.mrb[0].mxu0
      %v418 = vpop.f32.mrb[0].mxu0
      %419 = vdwg.mxu0
      %v420 = vadd.f32 %v338, %v414
      %v421 = vadd.f32 %v340, %v416
      %422 = vrot.lane.b32.xlu0 %v210, 15
      %v423 = vpop.permute.xlu0 %422
      %424 = vrot.lane.b32.xlu0 %v211, 15
      %v425 = vpop.permute.xlu0 %424
      %vm426 = vcmp.lt.s32.totalorder %v221, 15
      %v427 = vsel %vm426, %v423, %v425
      %v428 = vsel %vm426, %v425, %v423
      %s429 = scalar_lea.vmem %s2, 4
      %v430 = vld [vmem:[%s429] sm:$0x3]
      %v432 = vlaneseq
      %v433 = vshrl.u32 %v432, 7
      %v434 = vsub.s32 0, %v433
      %v435 = vrot.slane %v430, %v434
      %v436 = vlaneseq
      %v437 = vshrl.u32 %v436, 7
      %v438 = vsub.s32 1, %v437
      %v439 = vrot.slane %v430, %v438
      %v442 = vmul.f32 %v428, %v435
      %v443 = vmul.f32 %v427, %v439
      %s444 = scalar_lea.vmem %s1, 8
      %v445 = vld [vmem:[%s444] sm:$0xf]
      %v446 = vpack.c.bf16 %v442, %v442
      %v447 = vpack.c.bf16 %v443, %v443
      %v449 = vsel %vm242, %v445, 0
      %v452 = vsel %vm246, %v446, 0
      %v455 = vsel %vm246, %v447, 0
      %457 = vmatprep.subr.bf16.mxu0 %v455
      %458 = vmatpush1.bf16.msra.mxu0 %v452
      %459 = vmatprep.subr.bf16.mxu0 0
      %460 = vmatpush1.bf16.msra.mxu0 0
      %461 = vmatprep.subr.bf16.mxu0 0
      %462 = vmatpush1.bf16.msra.mxu0 0
      %463 = vmatprep.subr.bf16.mxu0 0
      %464 = vmatpush1.bf16.msra.mxu0 0
      %465 = vmatprep.subr.bf16.mxu0 0
      %466 = vmatpush1.bf16.msra.mxu0 0
      %467 = vmatprep.subr.bf16.mxu0 0
      %468 = vmatpush1.bf16.msra.mxu0 0
      %469 = vmatprep.subr.bf16.mxu0 0
      %470 = vmatpush1.bf16.msra.mxu0 0
      %471 = vmatprep.subr.bf16.mxu0 0
      %472 = vmatpush1.bf16.msra.mxu0 0
      %473 = vmatprep.subr.bf16.mxu0 0
      %474 = vmatpush1.bf16.msra.mxu0 0
      %475 = vmatprep.subr.bf16.mxu0 0
      %476 = vmatpush1.bf16.msra.mxu0 0
      %477 = vmatprep.subr.bf16.mxu0 0
      %478 = vmatpush1.bf16.msra.mxu0 0
      %479 = vmatprep.subr.bf16.mxu0 0
      %480 = vmatpush1.bf16.msra.mxu0 0
      %481 = vmatprep.subr.bf16.mxu0 0
      %482 = vmatpush1.bf16.msra.mxu0 0
      %483 = vmatprep.subr.bf16.mxu0 0
      %484 = vmatpush1.bf16.msra.mxu0 0
      %485 = vmatprep.subr.bf16.mxu0 0
      %486 = vmatpush1.bf16.msra.mxu0 0
      %487 = vmatprep.subr.bf16.mxu0 0
      %488 = vmatpush1.bf16.msra.mxu0 0
      %489 = vmatprep.mubr.bf16.mxu0 0
      %490 = vmatmul.mubr.bf16.gmra.mrb[0].mxu0 %v449
      %v491 = vpop.f32.mrb[0].mxu0
      %v492 = vadd.f32 0.0, %v491
      %v493 = vpop.f32.mrb[0].mxu0
      %v494 = vadd.f32 0.0, %v493
      %v495 = vpop.f32.mrb[0].mxu0
      %v496 = vpop.f32.mrb[0].mxu0
      %497 = vdwg.mxu0
      %v498 = vadd.f32 %v420, %v492
      %v499 = vadd.f32 %v421, %v494
      %500 = vrot.lane.b32.xlu0 %v210, 1
      %v501 = vpop.permute.xlu0 %500
      %502 = vrot.lane.b32.xlu0 %v211, 1
      %v503 = vpop.permute.xlu0 %502
      %vm504 = vcmp.lt.s32.totalorder %v221, 1
      %v505 = vsel %vm504, %v501, %v503
      %v506 = vsel %vm504, %v503, %v501
      %s507 = scalar_lea.vmem %s2, 6
      %v508 = vld [vmem:[%s507] sm:$0x3]
      %v510 = vlaneseq
      %v511 = vshrl.u32 %v510, 7
      %v512 = vsub.s32 0, %v511
      %v513 = vrot.slane %v508, %v512
      %v514 = vlaneseq
      %v515 = vshrl.u32 %v514, 7
      %v516 = vsub.s32 1, %v515
      %v517 = vrot.slane %v508, %v516
      %v520 = vmul.f32 %v506, %v513
      %v521 = vmul.f32 %v505, %v517
      %s522 = scalar_lea.vmem %s1, 12
      %v523 = vld [vmem:[%s522] sm:$0xf]
      %v524 = vpack.c.bf16 %v520, %v520
      %v525 = vpack.c.bf16 %v521, %v521
      %v527 = vsel %vm242, %v523, 0
      %v530 = vsel %vm246, %v524, 0
      %v533 = vsel %vm246, %v525, 0
      %535 = vmatprep.subr.bf16.mxu0 %v533
      %536 = vmatpush1.bf16.msra.mxu0 %v530
      %537 = vmatprep.subr.bf16.mxu0 0
      %538 = vmatpush1.bf16.msra.mxu0 0
      %539 = vmatprep.subr.bf16.mxu0 0
      %540 = vmatpush1.bf16.msra.mxu0 0
      %541 = vmatprep.subr.bf16.mxu0 0
      %542 = vmatpush1.bf16.msra.mxu0 0
      %543 = vmatprep.subr.bf16.mxu0 0
      %544 = vmatpush1.bf16.msra.mxu0 0
      %545 = vmatprep.subr.bf16.mxu0 0
      %546 = vmatpush1.bf16.msra.mxu0 0
      %547 = vmatprep.subr.bf16.mxu0 0
      %548 = vmatpush1.bf16.msra.mxu0 0
      %549 = vmatprep.subr.bf16.mxu0 0
      %550 = vmatpush1.bf16.msra.mxu0 0
      %551 = vmatprep.subr.bf16.mxu0 0
      %552 = vmatpush1.bf16.msra.mxu0 0
      %553 = vmatprep.subr.bf16.mxu0 0
      %554 = vmatpush1.bf16.msra.mxu0 0
      %555 = vmatprep.subr.bf16.mxu0 0
      %556 = vmatpush1.bf16.msra.mxu0 0
      %557 = vmatprep.subr.bf16.mxu0 0
      %558 = vmatpush1.bf16.msra.mxu0 0
      %559 = vmatprep.subr.bf16.mxu0 0
      %560 = vmatpush1.bf16.msra.mxu0 0
      %561 = vmatprep.subr.bf16.mxu0 0
      %562 = vmatpush1.bf16.msra.mxu0 0
      %563 = vmatprep.subr.bf16.mxu0 0
      %564 = vmatpush1.bf16.msra.mxu0 0
      %565 = vmatprep.subr.bf16.mxu0 0
      %566 = vmatpush1.bf16.msra.mxu0 0
      %567 = vmatprep.mubr.bf16.mxu0 0
      %568 = vmatmul.mubr.bf16.gmra.mrb[0].mxu0 %v527
      %v569 = vpop.f32.mrb[0].mxu0
      %v570 = vadd.f32 0.0, %v569
      %v571 = vpop.f32.mrb[0].mxu0
      %v572 = vadd.f32 0.0, %v571
      %v573 = vpop.f32.mrb[0].mxu0
      %v574 = vpop.f32.mrb[0].mxu0
      %575 = vdwg.mxu0
      %v576 = vadd.f32 %v498, %v570
      %v577 = vadd.f32 %v499, %v572
      %578 = vrot.lane.b32.xlu0 %v210, 127
      %v579 = vpop.permute.xlu0 %578
      %580 = vrot.lane.b32.xlu0 %v211, 127
      %v581 = vpop.permute.xlu0 %580
      %vm582 = vcmp.lt.s32.totalorder %v221, 127
      %v583 = vsel %vm582, %v579, %v581
      %v584 = vsel %vm582, %v581, %v579
      %s585 = scalar_lea.vmem %s2, 10
      %v586 = vld [vmem:[%s585] sm:$0x3]
      %v588 = vlaneseq
      %v589 = vshrl.u32 %v588, 7
      %v590 = vsub.s32 0, %v589
      %v591 = vrot.slane %v586, %v590
      %v592 = vlaneseq
      %v593 = vshrl.u32 %v592, 7
      %v594 = vsub.s32 1, %v593
      %v595 = vrot.slane %v586, %v594
      %v598 = vmul.f32 %v583, %v591
      %v599 = vmul.f32 %v584, %v595
      %s600 = scalar_lea.vmem %s1, 20
      %v601 = vld [vmem:[%s600] sm:$0xf]
      %v602 = vpack.c.bf16 %v598, %v598
      %v603 = vpack.c.bf16 %v599, %v599
      %v605 = vsel %vm242, %v601, 0
      %v608 = vsel %vm246, %v602, 0
      %v611 = vsel %vm246, %v603, 0
      %613 = vmatprep.subr.bf16.mxu0 %v611
      %614 = vmatpush1.bf16.msra.mxu0 %v608
      %615 = vmatprep.subr.bf16.mxu0 0
      %616 = vmatpush1.bf16.msra.mxu0 0
      %617 = vmatprep.subr.bf16.mxu0 0
      %618 = vmatpush1.bf16.msra.mxu0 0
      %619 = vmatprep.subr.bf16.mxu0 0
      %620 = vmatpush1.bf16.msra.mxu0 0
      %621 = vmatprep.subr.bf16.mxu0 0
      %622 = vmatpush1.bf16.msra.mxu0 0
      %623 = vmatprep.subr.bf16.mxu0 0
      %624 = vmatpush1.bf16.msra.mxu0 0
      %625 = vmatprep.subr.bf16.mxu0 0
      %626 = vmatpush1.bf16.msra.mxu0 0
      %627 = vmatprep.subr.bf16.mxu0 0
      %628 = vmatpush1.bf16.msra.mxu0 0
      %629 = vmatprep.subr.bf16.mxu0 0
      %630 = vmatpush1.bf16.msra.mxu0 0
      %631 = vmatprep.subr.bf16.mxu0 0
      %632 = vmatpush1.bf16.msra.mxu0 0
      %633 = vmatprep.subr.bf16.mxu0 0
      %634 = vmatpush1.bf16.msra.mxu0 0
      %635 = vmatprep.subr.bf16.mxu0 0
      %636 = vmatpush1.bf16.msra.mxu0 0
      %637 = vmatprep.subr.bf16.mxu0 0
      %638 = vmatpush1.bf16.msra.mxu0 0
      %639 = vmatprep.subr.bf16.mxu0 0
      %640 = vmatpush1.bf16.msra.mxu0 0
      %641 = vmatprep.subr.bf16.mxu0 0
      %642 = vmatpush1.bf16.msra.mxu0 0
      %643 = vmatprep.subr.bf16.mxu0 0
      %644 = vmatpush1.bf16.msra.mxu0 0
      %645 = vmatprep.mubr.bf16.mxu0 0
      %646 = vmatmul.mubr.bf16.gmra.mrb[0].mxu0 %v605
      %v647 = vpop.f32.mrb[0].mxu0
      %v648 = vadd.f32 0.0, %v647
      %v649 = vpop.f32.mrb[0].mxu0
      %v650 = vadd.f32 0.0, %v649
      %v651 = vpop.f32.mrb[0].mxu0
      %v652 = vpop.f32.mrb[0].mxu0
      %653 = vdwg.mxu0
      %v654 = vadd.f32 %v576, %v648
      %v655 = vadd.f32 %v577, %v650
      %656 = vrot.lane.b32.xlu0 %v210, 113
      %v657 = vpop.permute.xlu0 %656
      %658 = vrot.lane.b32.xlu0 %v211, 113
      %v659 = vpop.permute.xlu0 %658
      %vm660 = vcmp.lt.s32.totalorder %v221, 113
      %v661 = vsel %vm660, %v657, %v659
      %v662 = vsel %vm660, %v659, %v657
      %s663 = scalar_lea.vmem %s2, 12
      %v664 = vld [vmem:[%s663] sm:$0x3]
      %v666 = vlaneseq
      %v667 = vshrl.u32 %v666, 7
      %v668 = vsub.s32 0, %v667
      %v669 = vrot.slane %v664, %v668
      %v670 = vlaneseq
      %v671 = vshrl.u32 %v670, 7
      %v672 = vsub.s32 1, %v671
      %v673 = vrot.slane %v664, %v672
      %v676 = vmul.f32 %v661, %v669
      %v677 = vmul.f32 %v662, %v673
      %s678 = scalar_lea.vmem %s1, 24
      %v679 = vld [vmem:[%s678] sm:$0xf]
      %v680 = vpack.c.bf16 %v676, %v676
      %v681 = vpack.c.bf16 %v677, %v677
      %v683 = vsel %vm242, %v679, 0
      %v686 = vsel %vm246, %v680, 0
      %v689 = vsel %vm246, %v681, 0
      %691 = vmatprep.subr.bf16.mxu0 %v689
      %692 = vmatpush1.bf16.msra.mxu0 %v686
      %693 = vmatprep.subr.bf16.mxu0 0
      %694 = vmatpush1.bf16.msra.mxu0 0
      %695 = vmatprep.subr.bf16.mxu0 0
      %696 = vmatpush1.bf16.msra.mxu0 0
      %697 = vmatprep.subr.bf16.mxu0 0
      %698 = vmatpush1.bf16.msra.mxu0 0
      %699 = vmatprep.subr.bf16.mxu0 0
      %700 = vmatpush1.bf16.msra.mxu0 0
      %701 = vmatprep.subr.bf16.mxu0 0
      %702 = vmatpush1.bf16.msra.mxu0 0
      %703 = vmatprep.subr.bf16.mxu0 0
      %704 = vmatpush1.bf16.msra.mxu0 0
      %705 = vmatprep.subr.bf16.mxu0 0
      %706 = vmatpush1.bf16.msra.mxu0 0
      %707 = vmatprep.subr.bf16.mxu0 0
      %708 = vmatpush1.bf16.msra.mxu0 0
      %709 = vmatprep.subr.bf16.mxu0 0
      %710 = vmatpush1.bf16.msra.mxu0 0
      %711 = vmatprep.subr.bf16.mxu0 0
      %712 = vmatpush1.bf16.msra.mxu0 0
      %713 = vmatprep.subr.bf16.mxu0 0
      %714 = vmatpush1.bf16.msra.mxu0 0
      %715 = vmatprep.subr.bf16.mxu0 0
      %716 = vmatpush1.bf16.msra.mxu0 0
      %717 = vmatprep.subr.bf16.mxu0 0
      %718 = vmatpush1.bf16.msra.mxu0 0
      %719 = vmatprep.subr.bf16.mxu0 0
      %720 = vmatpush1.bf16.msra.mxu0 0
      %721 = vmatprep.subr.bf16.mxu0 0
      %722 = vmatpush1.bf16.msra.mxu0 0
      %723 = vmatprep.mubr.bf16.mxu0 0
      %724 = vmatmul.mubr.bf16.gmra.mrb[0].mxu0 %v683
      %v725 = vpop.f32.mrb[0].mxu0
      %v726 = vadd.f32 0.0, %v725
      %v727 = vpop.f32.mrb[0].mxu0
      %v728 = vadd.f32 0.0, %v727
      %v729 = vpop.f32.mrb[0].mxu0
      %v730 = vpop.f32.mrb[0].mxu0
      %731 = vdwg.mxu0
      %v732 = vadd.f32 %v654, %v726
      %v733 = vadd.f32 %v655, %v728
      %734 = vrot.lane.b32.xlu0 %v210, 112
      %v735 = vpop.permute.xlu0 %734
      %736 = vrot.lane.b32.xlu0 %v211, 112
      %v737 = vpop.permute.xlu0 %736
      %vm738 = vcmp.lt.s32.totalorder %v221, 112
      %v739 = vsel %vm738, %v735, %v737
      %v740 = vsel %vm738, %v737, %v735
      %s741 = scalar_lea.vmem %s2, 14
      %v742 = vld [vmem:[%s741] sm:$0x3]
      %v744 = vlaneseq
      %v745 = vshrl.u32 %v744, 7
      %v746 = vsub.s32 0, %v745
      %v747 = vrot.slane %v742, %v746
      %v748 = vlaneseq
      %v749 = vshrl.u32 %v748, 7
      %v750 = vsub.s32 1, %v749
      %v751 = vrot.slane %v742, %v750
      %v754 = vmul.f32 %v739, %v747
      %v755 = vmul.f32 %v740, %v751
      %s756 = scalar_lea.vmem %s1, 28
      %v757 = vld [vmem:[%s756] sm:$0xf]
      %v758 = vpack.c.bf16 %v754, %v754
      %v759 = vpack.c.bf16 %v755, %v755
      %v761 = vsel %vm242, %v757, 0
      %v764 = vsel %vm246, %v758, 0
      %v767 = vsel %vm246, %v759, 0
      %769 = vmatprep.subr.bf16.mxu0 %v767
      %770 = vmatpush1.bf16.msra.mxu0 %v764
      %771 = vmatprep.subr.bf16.mxu0 0
      %772 = vmatpush1.bf16.msra.mxu0 0
      %773 = vmatprep.subr.bf16.mxu0 0
      %774 = vmatpush1.bf16.msra.mxu0 0
      %775 = vmatprep.subr.bf16.mxu0 0
      %776 = vmatpush1.bf16.msra.mxu0 0
      %777 = vmatprep.subr.bf16.mxu0 0
      %778 = vmatpush1.bf16.msra.mxu0 0
      %779 = vmatprep.subr.bf16.mxu0 0
      %780 = vmatpush1.bf16.msra.mxu0 0
      %781 = vmatprep.subr.bf16.mxu0 0
      %782 = vmatpush1.bf16.msra.mxu0 0
      %783 = vmatprep.subr.bf16.mxu0 0
      %784 = vmatpush1.bf16.msra.mxu0 0
      %785 = vmatprep.subr.bf16.mxu0 0
      %786 = vmatpush1.bf16.msra.mxu0 0
      %787 = vmatprep.subr.bf16.mxu0 0
      %788 = vmatpush1.bf16.msra.mxu0 0
      %789 = vmatprep.subr.bf16.mxu0 0
      %790 = vmatpush1.bf16.msra.mxu0 0
      %791 = vmatprep.subr.bf16.mxu0 0
      %792 = vmatpush1.bf16.msra.mxu0 0
      %793 = vmatprep.subr.bf16.mxu0 0
      %794 = vmatpush1.bf16.msra.mxu0 0
      %795 = vmatprep.subr.bf16.mxu0 0
      %796 = vmatpush1.bf16.msra.mxu0 0
      %797 = vmatprep.subr.bf16.mxu0 0
      %798 = vmatpush1.bf16.msra.mxu0 0
      %799 = vmatprep.subr.bf16.mxu0 0
      %800 = vmatpush1.bf16.msra.mxu0 0
      %801 = vmatprep.mubr.bf16.mxu0 0
      %802 = vmatmul.mubr.bf16.gmra.mrb[0].mxu0 %v761
      %v803 = vpop.f32.mrb[0].mxu0
      %v804 = vadd.f32 0.0, %v803
      %v805 = vpop.f32.mrb[0].mxu0
      %v806 = vadd.f32 0.0, %v805
      %v807 = vpop.f32.mrb[0].mxu0
      %v808 = vpop.f32.mrb[0].mxu0
      %809 = vdwg.mxu0
      %v810 = vadd.f32 %v732, %v804
      %v811 = vadd.f32 %v733, %v806
      %812 = vrot.lane.b32.xlu0 %v210, 111
      %v813 = vpop.permute.xlu0 %812
      %814 = vrot.lane.b32.xlu0 %v211, 111
      %v815 = vpop.permute.xlu0 %814
      %vm816 = vcmp.lt.s32.totalorder %v221, 111
      %v817 = vsel %vm816, %v813, %v815
      %v818 = vsel %vm816, %v815, %v813
      %s819 = scalar_lea.vmem %s2, 16
      %v820 = vld [vmem:[%s819] sm:$0x3]
      %v822 = vlaneseq
      %v823 = vshrl.u32 %v822, 7
      %v824 = vsub.s32 0, %v823
      %v825 = vrot.slane %v820, %v824
      %v826 = vlaneseq
      %v827 = vshrl.u32 %v826, 7
      %v828 = vsub.s32 1, %v827
      %v829 = vrot.slane %v820, %v828
      %v832 = vmul.f32 %v817, %v825
      %v833 = vmul.f32 %v818, %v829
      %s834 = scalar_lea.vmem %s1, 32
      %v835 = vld [vmem:[%s834] sm:$0xf]
      %v836 = vpack.c.bf16 %v832, %v832
      %v837 = vpack.c.bf16 %v833, %v833
      %v839 = vsel %vm242, %v835, 0
      %v842 = vsel %vm246, %v836, 0
      %v845 = vsel %vm246, %v837, 0
      %847 = vmatprep.subr.bf16.mxu0 %v845
      %848 = vmatpush1.bf16.msra.mxu0 %v842
      %849 = vmatprep.subr.bf16.mxu0 0
      %850 = vmatpush1.bf16.msra.mxu0 0
      %851 = vmatprep.subr.bf16.mxu0 0
      %852 = vmatpush1.bf16.msra.mxu0 0
      %853 = vmatprep.subr.bf16.mxu0 0
      %854 = vmatpush1.bf16.msra.mxu0 0
      %855 = vmatprep.subr.bf16.mxu0 0
      %856 = vmatpush1.bf16.msra.mxu0 0
      %857 = vmatprep.subr.bf16.mxu0 0
      %858 = vmatpush1.bf16.msra.mxu0 0
      %859 = vmatprep.subr.bf16.mxu0 0
      %860 = vmatpush1.bf16.msra.mxu0 0
      %861 = vmatprep.subr.bf16.mxu0 0
      %862 = vmatpush1.bf16.msra.mxu0 0
      %863 = vmatprep.subr.bf16.mxu0 0
      %864 = vmatpush1.bf16.msra.mxu0 0
      %865 = vmatprep.subr.bf16.mxu0 0
      %866 = vmatpush1.bf16.msra.mxu0 0
      %867 = vmatprep.subr.bf16.mxu0 0
      %868 = vmatpush1.bf16.msra.mxu0 0
      %869 = vmatprep.subr.bf16.mxu0 0
      %870 = vmatpush1.bf16.msra.mxu0 0
      %871 = vmatprep.subr.bf16.mxu0 0
      %872 = vmatpush1.bf16.msra.mxu0 0
      %873 = vmatprep.subr.bf16.mxu0 0
      %874 = vmatpush1.bf16.msra.mxu0 0
      %875 = vmatprep.subr.bf16.mxu0 0
      %876 = vmatpush1.bf16.msra.mxu0 0
      %877 = vmatprep.subr.bf16.mxu0 0
      %878 = vmatpush1.bf16.msra.mxu0 0
      %879 = vmatprep.mubr.bf16.mxu0 0
      %880 = vmatmul.mubr.bf16.gmra.mrb[0].mxu0 %v839
      %v881 = vpop.f32.mrb[0].mxu0
      %v882 = vadd.f32 0.0, %v881
      %v883 = vpop.f32.mrb[0].mxu0
      %v884 = vadd.f32 0.0, %v883
      %v885 = vpop.f32.mrb[0].mxu0
      %v886 = vpop.f32.mrb[0].mxu0
      %887 = vdwg.mxu0
      %v888 = vadd.f32 %v810, %v882
      %v889 = vadd.f32 %v811, %v884
      %890 = vst [vmem:[%s204] sm:$0xff] %v888
      %891 = vst [vmem:[%s204 + $0x8] sm:$0xff] %v889
      %v892 = vadd.f32 %v888, %v889
      %893 = vadd.xlane.f32.xlu0 %v892
      %v894 = vpop.xlane.xlu0 %893
      %vm895 = vcmask 7168
      %896 = vst.msk [vmem:[%s208] sm:$0xff] %vm895, %v894
      %v897 = vmul.f32 %v888, %v888
      %v898 = vmul.f32 %v889, %v889
      %v899 = vadd.f32 %v897, %v898
      %900 = vadd.xlane.f32.xlu0 %v899
      %v901 = vpop.xlane.xlu0 %900
      %vm902 = vcmask 15368
      %903 = vst.msk [vmem:[%s208] sm:$0xff] %vm902, %v901
      %p904 = scmp.lt.s32.totalorder %s16, 1
      %s905 = scalar_select %p904, %s16, 1
      %s906 = smul.addr %s905, 2
      %s907 = smul.addr %s906, 8
      %s908 = scalar_lea.vmem %s3, %s907
      %p909 = scmp.lt.s32.totalorder %s16, 1
      %s910 = scalar_select %p909, %s16, 1
      %s911 = smul.addr %s910, 8
      %s912 = scalar_lea.vmem %s4, %s911
      // Predicated region
      $region33: #{residual_block_pallas.3} parent=31 // pred_check
        %p913 = pneg %p102
      $region34: #{residual_block_pallas.3} parent=31 // pred_check_branch
        %915 = sbr.rel (%p913) target = $region36
      $region35: #{residual_block_pallas.3} parent=31 // pred_region
        _
      $region36: #{residual_block_pallas.3} parent=31 // pred_fallthru
        _
      // Predicated region
      $region37: #{residual_block_pallas.3} parent=31 // pred_check
        %p916 = pneg %p128
      $region38: #{residual_block_pallas.3} parent=31 // pred_check_branch
        %918 = sbr.rel (%p916) target = $region40
      $region39: #{residual_block_pallas.3} parent=31 // pred_region
        _
      $region40: #{residual_block_pallas.3} parent=31 // pred_fallthru
        _
    $region32: #{residual_block_pallas.3} parent=5 // pred_fallthru
      _
    %p919 = scmp.le.s32.totalorder 2, %s11
    // Predicated region
    $region41: #{residual_block_pallas.3} parent=5 // pred_check
      %p920 = pneg %p919
    $region42: #{residual_block_pallas.3} parent=5 // pred_check_branch
      %922 = sbr.rel (%p920) target = $region44
    $region43: #{residual_block_pallas.3} parent=5 // pred_region
      %s923 = ssub.s32 %s11, 2
      // Predicated region
      $region45: #{residual_block_pallas.3} parent=43 // pred_check
        %p924 = pneg %p108
      $region46: #{residual_block_pallas.3} parent=43 // pred_check_branch
        %926 = sbr.rel (%p924) target = $region48
      $region47: #{residual_block_pallas.3} parent=43 // pred_region
        %p927 = scmp.lt.s32.totalorder %s17, 1
        %s928 = scalar_select %p927, %s17, 1
        %s929 = smul.addr %s928, 2
        %s930 = smul.addr %s929, 8
        %s931 = scalar_lea.vmem %s3, %s930
      $region48: #{residual_block_pallas.3} parent=43 // pred_fallthru
        _
      // Predicated region
      $region49: #{residual_block_pallas.3} parent=43 // pred_check
        %p932 = pneg %p134
      $region50: #{residual_block_pallas.3} parent=43 // pred_check_branch
        %934 = sbr.rel (%p932) target = $region52
      $region51: #{residual_block_pallas.3} parent=43 // pred_region
        %p935 = scmp.lt.s32.totalorder %s17, 1
        %s936 = scalar_select %p935, %s17, 1
        %s937 = smul.addr %s936, 8
        %s938 = scalar_lea.vmem %s4, %s937
      $region52: #{residual_block_pallas.3} parent=43 // pred_fallthru
        _
    $region44: #{residual_block_pallas.3} parent=5 // pred_fallthru
      _
  $region6: #{residual_block_pallas.3} parent=0 // loop_footer
    %s15 = sadd.s32 1, %s11
  $region7: #{residual_block_pallas.3} parent=0 // loop_footer_branch
    %10 = sbr.rel target = $region3
  $region8: #{residual_block_pallas.3} parent=0 // loop_exit
    _

</llo_original>
